<compile_context>
chip_gen: v7x
topology: tpu7x:2x2x1
jax: 0.10.0
libtpu: 0.0.40
codegen_flags: <defaults>
</compile_context>

<pallas_src>
import jax
import jax.numpy as jnp
from jax import lax
from jax.experimental import pallas as pl
from jax.experimental.pallas import tpu as pltpu

EPS = 1e-5


def basic_block_kernel(x_ref, v1_ref, v2_ref, b_ref, o_ref):
    """conv3x3 -> BN -> ReLU -> conv3x3 -> BN -> +identity -> ReLU (B images).

    x_ref  : (B, H, W*C)   lane-dense packed activations, bf16
    v*_ref : (W*C, 3*W*C)  row-Toeplitz packed conv weights, BN scale folded, bf16
    b_ref  : (2, W*C)      folded BN shifts (row 0: bn1, row 1: bn2), f32
    o_ref  : (B, H, W*C)   packed output, f32
    """
    B, H, WC = x_ref.shape
    M = B * H

    x = x_ref[...].reshape(M, WC)                    # (M, WC) bf16

    # Per-image H-boundary masks on the flattened row axis (shared by both
    # convs).  Row r belongs to image r // H at height y = r % H.
    row = lax.broadcasted_iota(jnp.int32, (M, 1), 0)
    has_up = (row % H) != 0                          # a y-1 neighbor exists
    has_dn = (row % H) != (H - 1)                    # a y+1 neighbor exists

    def conv3x3(inp_bf16, v_ref):
        # One (M,WC)x(WC,WC) MXU matmul per kernel row dy; accumulate so only
        # an (M, WC) f32 slab is live at a time.  The W-direction taps and the
        # SAME padding in W are folded into the Toeplitz band; the H boundary
        # is handled with XLU sublane rolls + masks (no shift matmuls).
        acc = jnp.dot(inp_bf16, v_ref[:, pl.ds(WC, WC)],
                      preferred_element_type=jnp.float32)          # dy = 1
        p0 = jnp.dot(inp_bf16, v_ref[:, pl.ds(0, WC)],
                     preferred_element_type=jnp.float32)           # dy = 0
        acc = acc + jnp.where(has_up, pltpu.roll(p0, 1, axis=0), 0.0)
        p2 = jnp.dot(inp_bf16, v_ref[:, pl.ds(2 * WC, WC)],
                     preferred_element_type=jnp.float32)           # dy = 2
        acc = acc + jnp.where(has_dn, pltpu.roll(p2, M - 1, axis=0), 0.0)
        return acc

    b1 = b_ref[0:1, :]                               # (1, WC) f32
    b2 = b_ref[1:2, :]

    # conv1 -> bn1 -> relu (BN scale already folded into v1; shift added here)
    mid = jnp.maximum(conv3x3(x, v1_ref) + b1, 0.0)

    # conv2 -> bn2 -> +identity -> relu (identity is x itself: stride=1,
    # downsample=None, depth=None)
    out = conv3x3(mid.astype(jnp.bfloat16), v2_ref) + b2 + x.astype(jnp.float32)
    o_ref[...] = jnp.maximum(out, 0.0).reshape(B, H, WC).astype(o_ref.dtype)


def _toeplitz_conv_weight(w_oihw, W):
    """PyTorch conv weight (Cout, Cin, 3, 3) -> packed (W*Cin, 3*W*Cout) f32.

    Column block dy holds the row-Toeplitz expansion of kernel row dy over the
    packed (w, c) lane axis; the three W-direction taps and the SAME zero
    padding in W are folded into the band structure.
    """
    Cout, Cin, KH, KW = w_oihw.shape
    w_hwio = jnp.transpose(w_oihw, (2, 3, 1, 0)).astype(jnp.float32)  # (3,3,Ci,Co)
    blocks = []
    for dy in range(KH):
        m = jnp.zeros((W * Cin, W * Cout), jnp.float32)
        for dx in range(KW):
            # ones at [wi, wo] with wi = wo + dx - 1; out-of-range taps (the
            # SAME padding columns) drop out of the band.
            shift = jnp.eye(W, W, k=1 - dx, dtype=jnp.float32)
            m = m + jnp.einsum('pq,io->piqo', shift,
                               w_hwio[dy, dx]).reshape(W * Cin, W * Cout)
        blocks.append(m)
    return jnp.concatenate(blocks, axis=1)           # (W*Cin, 3*W*Cout)


def _pick_images_per_block(N, H, m_target=128):
    """Largest divisor B of N with B*H <= m_target, keeping grid >= 2 if possible."""
    cap = max(1, m_target // H)
    best = 1
    for b in range(1, min(N, cap) + 1):
        if N % b == 0:
            best = b
    if N > 1 and N // best < 2:          # keep both v7x TensorCores busy
        for b in range(best - 1, 0, -1):
            if N % b == 0 and N // b >= 2:
                best = b
                break
    return best


def basic_block_forward(x_nchw, w1, w2, g1, be1, m1, v1, g2, be2, m2, v2,
                        *, images_per_block=None):
    """Wrapper: NCHW in / NCHW out, stride=1, downsample=None, depth=None."""
    N, C, H, W = x_nchw.shape
    WC = W * C

    if images_per_block is None:
        images_per_block = _pick_images_per_block(N, H)
    B = images_per_block
    assert N % B == 0
    G = N // B

    # Lane-dense packed activations: NCHW -> NHWC -> (N, H, W*C), bf16 operands.
    xp = jnp.transpose(x_nchw, (0, 2, 3, 1)).reshape(N, H, WC).astype(jnp.bfloat16)

    # Eval-mode BN folded to per-channel scale/shift; scale goes into the
    # Toeplitz weight columns (packed column w*C + c carries channel c).
    inv1 = (g1 / jnp.sqrt(v1 + EPS)).astype(jnp.float32)
    inv2 = (g2 / jnp.sqrt(v2 + EPS)).astype(jnp.float32)
    v1m = (_toeplitz_conv_weight(w1, W) * jnp.tile(inv1, 3 * W)[None, :]).astype(jnp.bfloat16)
    v2m = (_toeplitz_conv_weight(w2, W) * jnp.tile(inv2, 3 * W)[None, :]).astype(jnp.bfloat16)
    b_all = jnp.stack([jnp.tile((be1 - m1 * inv1).astype(jnp.float32), W),
                       jnp.tile((be2 - m2 * inv2).astype(jnp.float32), W)])  # (2, WC) f32

    # Advisory cost hint: MXU flops actually issued (includes the Toeplitz
    # zero band, so it overstates useful conv work -- see TODO at top).
    mxu_flops = int(12 * N * H * WC * WC)
    bytes_accessed = int(2 * xp.size + 2 * (v1m.size + v2m.size)
                         + 4 * b_all.size + 4 * N * H * WC)

    out_packed = pl.pallas_call(
        basic_block_kernel,
        out_shape=jax.ShapeDtypeStruct((N, H, WC), jnp.float32),
        grid=(G,),
        in_specs=[
            pl.BlockSpec((B, H, WC), lambda g: (g, 0, 0)),      # activations
            pl.BlockSpec((WC, 3 * WC), lambda g: (0, 0)),       # conv1 Toeplitz (BN1 folded)
            pl.BlockSpec((WC, 3 * WC), lambda g: (0, 0)),       # conv2 Toeplitz (BN2 folded)
            pl.BlockSpec((2, WC), lambda g: (0, 0)),            # BN shifts
        ],
        out_specs=pl.BlockSpec((B, H, WC), lambda g: (g, 0, 0)),
        compiler_params=pltpu.CompilerParams(
            dimension_semantics=("parallel",)),
        cost_estimate=pl.CostEstimate(
            flops=mxu_flops, transcendentals=0, bytes_accessed=bytes_accessed),
    )(xp, v1m, v2m, b_all)

    # (N, H, W*C) -> NCHW
    return jnp.transpose(out_packed.reshape(N, H, W, C), (0, 3, 1, 2))


def reference_forward(x_nchw, w1, w2, g1, be1, m1, v1, g2, be2, m2, v2):
    """Pure-JAX reference (same eval-mode BN folding), HIGHEST precision."""
    x = jnp.transpose(x_nchw, (0, 2, 3, 1)).astype(jnp.float32)
    w1_hw = jnp.transpose(w1, (2, 3, 1, 0)).astype(jnp.float32)
    w2_hw = jnp.transpose(w2, (2, 3, 1, 0)).astype(jnp.float32)
    dn = ('NHWC', 'HWIO', 'NHWC')

    y = lax.conv_general_dilated(x, w1_hw, (1, 1), 'SAME',
                                 dimension_numbers=dn,
                                 precision=lax.Precision.HIGHEST)
    y = y * (g1 / jnp.sqrt(v1 + EPS)) + (be1 - m1 * g1 / jnp.sqrt(v1 + EPS))
    y = jnp.maximum(y, 0.0)
    y = lax.conv_general_dilated(y, w2_hw, (1, 1), 'SAME',
                                 dimension_numbers=dn,
                                 precision=lax.Precision.HIGHEST)
    y = y * (g2 / jnp.sqrt(v2 + EPS)) + (be2 - m2 * g2 / jnp.sqrt(v2 + EPS))
    y = jnp.maximum(y + x, 0.0)
    return jnp.transpose(y, (0, 3, 1, 2))


if __name__ == "__main__":
    # Shapes consistent with BasicBlock(inplanes=8, planes=8, stride=1,
    # downsample=None, depth=None).  W*C = 128 -> perfectly lane-dense packing.
    # N=16 with 8 images per grid step -> M = 128 rows per conv matmul, grid=2.
    N, C, H, W = 16, 8, 16, 16
    key = jax.random.PRNGKey(0)
    keys = jax.random.split(key, 12)

    x = jax.random.normal(keys[0], (N, C, H, W), jnp.float32)
    w1 = jax.random.normal(keys[1], (C, C, 3, 3), jnp.float32) * 0.1
    w2 = jax.random.normal(keys[2], (C, C, 3, 3), jnp.float32) * 0.1
    g1 = 1.0 + 0.1 * jax.random.normal(keys[3], (C,), jnp.float32)
    be1 = 0.1 * jax.random.normal(keys[4], (C,), jnp.float32)
    m1 = 0.1 * jax.random.normal(keys[5], (C,), jnp.float32)
    v1 = 1.0 + 0.1 * jax.random.uniform(keys[6], (C,), jnp.float32)
    g2 = 1.0 + 0.1 * jax.random.normal(keys[7], (C,), jnp.float32)
    be2 = 0.1 * jax.random.normal(keys[8], (C,), jnp.float32)
    m2 = 0.1 * jax.random.normal(keys[9], (C,), jnp.float32)
    v2 = 1.0 + 0.1 * jax.random.uniform(keys[10], (C,), jnp.float32)

    out = basic_block_forward(x, w1, w2, g1, be1, m1, v1, g2, be2, m2, v2)
    out = jax.block_until_ready(out)

    ref = reference_forward(x, w1, w2, g1, be1, m1, v1, g2, be2, m2, v2)
    ref = jax.block_until_ready(ref)

    assert out.shape == (N, C, H, W), out.shape
    # Tolerance documents the deliberate bf16 MXU operands (f32 accumulate)
    # vs the f32 HIGHEST-precision reference.
    assert jnp.allclose(out, ref, atol=3e-2, rtol=3e-2), (
        float(jnp.max(jnp.abs(out - ref))))

    print("KERNEL_OK")
</pallas_src>

<mosaic_0001>
module attributes {stable_mosaic.version = 11 : i64} {
  func.func @basic_block_kernel(%arg0: i32, %arg1: memref<8x16x128xbf16, #tpu.memory_space<vmem>>, %arg2: memref<128x384xbf16, #tpu.memory_space<vmem>>, %arg3: memref<128x384xbf16, #tpu.memory_space<vmem>>, %arg4: memref<2x128xf32, #tpu.memory_space<vmem>>, %arg5: memref<8x16x128xf32, #tpu.memory_space<vmem>>) attributes {dimension_semantics = [#tpu.dimension_semantics<parallel>], iteration_bounds = array<i64: 2>, scalar_prefetch = 0 : i64, scratch_operands = 0 : i64, tpu.core_type = #tpu.core_type<tc>, window_params = [{transform_indices = @transform_0, window_bounds = array<i64: 8, 16, 128>}, {pipeline_mode = #tpu.pipeline_mode<synchronous>, transform_indices = @transform_1, window_bounds = array<i64: 128, 384>}, {pipeline_mode = #tpu.pipeline_mode<synchronous>, transform_indices = @transform_2, window_bounds = array<i64: 128, 384>}, {pipeline_mode = #tpu.pipeline_mode<synchronous>, transform_indices = @transform_3, window_bounds = array<i64: 2, 128>}, {transform_indices = @transform_4, window_bounds = array<i64: 8, 16, 128>}]} {
    %c0 = arith.constant 0 : index
    %c0_0 = arith.constant 0 : index
    %c0_1 = arith.constant 0 : index
    %0 = vector.load %arg1[%c0, %c0_0, %c0_1] : memref<8x16x128xbf16, #tpu.memory_space<vmem>>, vector<8x16x128xbf16>
    %1 = vector.shape_cast %0 : vector<8x16x128xbf16> to vector<128x128xbf16>
    %2 = tpu.iota {dimensions = array<i32: 0>} : vector<128x1xi32>
    %c16_i32 = arith.constant 16 : i32
    %c0_i32 = arith.constant 0 : i32
    %3 = arith.cmpi eq, %c16_i32, %c0_i32 : i32
    %c1_i32 = arith.constant 1 : i32
    %4 = arith.select %3, %c1_i32, %c16_i32 : i32
    %5 = vector.broadcast %4 : i32 to vector<128x1xi32>
    %6 = arith.remsi %2, %5 : vector<128x1xi32>
    %c0_i32_2 = arith.constant 0 : i32
    %7 = vector.broadcast %c0_i32_2 : i32 to vector<128x1xi32>
    %8 = arith.cmpi ne, %6, %7 : vector<128x1xi32>
    %c0_i32_3 = arith.constant 0 : i32
    %9 = vector.broadcast %c0_i32_3 : i32 to vector<128x1xi32>
    %10 = arith.cmpi slt, %6, %9 : vector<128x1xi32>
    %c0_i32_4 = arith.constant 0 : i32
    %11 = arith.cmpi slt, %4, %c0_i32_4 : i32
    %12 = vector.broadcast %11 : i1 to vector<128x1xi1>
    %13 = vector.broadcast %12 : vector<128x1xi1> to vector<128x1xi1>
    %14 = arith.xori %10, %13 : vector<128x1xi1>
    %15 = arith.andi %14, %8 : vector<128x1xi1>
    %16 = vector.broadcast %4 : i32 to vector<128x1xi32>
    %17 = arith.addi %6, %16 : vector<128x1xi32>
    %18 = arith.select %15, %17, %6 : vector<128x1xi1>, vector<128x1xi32>
    %c0_i32_5 = arith.constant 0 : i32
    %19 = vector.broadcast %c0_i32_5 : i32 to vector<128x1xi32>
    %20 = arith.cmpi ne, %18, %19 : vector<128x1xi32>
    %c16_i32_6 = arith.constant 16 : i32
    %c0_i32_7 = arith.constant 0 : i32
    %21 = arith.cmpi eq, %c16_i32_6, %c0_i32_7 : i32
    %c1_i32_8 = arith.constant 1 : i32
    %22 = arith.select %21, %c1_i32_8, %c16_i32_6 : i32
    %23 = vector.broadcast %22 : i32 to vector<128x1xi32>
    %24 = arith.remsi %2, %23 : vector<128x1xi32>
    %c0_i32_9 = arith.constant 0 : i32
    %25 = vector.broadcast %c0_i32_9 : i32 to vector<128x1xi32>
    %26 = arith.cmpi ne, %24, %25 : vector<128x1xi32>
    %c0_i32_10 = arith.constant 0 : i32
    %27 = vector.broadcast %c0_i32_10 : i32 to vector<128x1xi32>
    %28 = arith.cmpi slt, %24, %27 : vector<128x1xi32>
    %c0_i32_11 = arith.constant 0 : i32
    %29 = arith.cmpi slt, %22, %c0_i32_11 : i32
    %30 = vector.broadcast %29 : i1 to vector<128x1xi1>
    %31 = vector.broadcast %30 : vector<128x1xi1> to vector<128x1xi1>
    %32 = arith.xori %28, %31 : vector<128x1xi1>
    %33 = arith.andi %32, %26 : vector<128x1xi1>
    %34 = vector.broadcast %22 : i32 to vector<128x1xi32>
    %35 = arith.addi %24, %34 : vector<128x1xi32>
    %36 = arith.select %33, %35, %24 : vector<128x1xi1>, vector<128x1xi32>
    %c15_i32 = arith.constant 15 : i32
    %37 = vector.broadcast %c15_i32 : i32 to vector<128x1xi32>
    %38 = arith.cmpi ne, %36, %37 : vector<128x1xi32>
    %c0_12 = arith.constant 0 : index
    %c0_13 = arith.constant 0 : index
    %39 = vector.load %arg4[%c0_12, %c0_13] : memref<2x128xf32, #tpu.memory_space<vmem>>, vector<1x128xf32>
    %c1 = arith.constant 1 : index
    %c0_14 = arith.constant 0 : index
    %40 = vector.load %arg4[%c1, %c0_14] : memref<2x128xf32, #tpu.memory_space<vmem>>, vector<1x128xf32>
    %c0_15 = arith.constant 0 : index
    %c128 = arith.constant 128 : index
    %41 = vector.load %arg2[%c0_15, %c128] : memref<128x384xbf16, #tpu.memory_space<vmem>>, vector<128x128xbf16>
    %cst = arith.constant dense<0.000000e+00> : vector<128x128xf32>
    %42 = tpu.matmul %1, %41, %cst {dimension_numbers = #tpu.dot_dimension_numbers<[1], [0], [0], [1], [0, 0, 1, 1], [], []>} : vector<128x128xbf16>, vector<128x128xbf16>, vector<128x128xf32> -> vector<128x128xf32>
    %c0_16 = arith.constant 0 : index
    %c0_17 = arith.constant 0 : index
    %43 = vector.load %arg2[%c0_16, %c0_17] : memref<128x384xbf16, #tpu.memory_space<vmem>>, vector<128x128xbf16>
    %cst_18 = arith.constant dense<0.000000e+00> : vector<128x128xf32>
    %44 = tpu.matmul %1, %43, %cst_18 {dimension_numbers = #tpu.dot_dimension_numbers<[1], [0], [0], [1], [0, 0, 1, 1], [], []>} : vector<128x128xbf16>, vector<128x128xbf16>, vector<128x128xf32> -> vector<128x128xf32>
    %c1_i32_19 = arith.constant 1 : i32
    %45 = tpu.dynamic_rotate %44 by %c1_i32_19 dim 0 : vector<128x128xf32>, i32 -> vector<128x128xf32>
    %cst_20 = arith.constant 0.000000e+00 : f32
    %46 = vector.shape_cast %20 : vector<128x1xi1> to vector<128x1xi1>
    %47 = vector.broadcast %46 : vector<128x1xi1> to vector<128x128xi1>
    %48 = vector.broadcast %cst_20 : f32 to vector<128x128xf32>
    %49 = arith.select %47, %45, %48 : vector<128x128xi1>, vector<128x128xf32>
    %50 = arith.addf %42, %49 : vector<128x128xf32>
    %c0_21 = arith.constant 0 : index
    %c256 = arith.constant 256 : index
    %51 = vector.load %arg2[%c0_21, %c256] : memref<128x384xbf16, #tpu.memory_space<vmem>>, vector<128x128xbf16>
    %cst_22 = arith.constant dense<0.000000e+00> : vector<128x128xf32>
    %52 = tpu.matmul %1, %51, %cst_22 {dimension_numbers = #tpu.dot_dimension_numbers<[1], [0], [0], [1], [0, 0, 1, 1], [], []>} : vector<128x128xbf16>, vector<128x128xbf16>, vector<128x128xf32> -> vector<128x128xf32>
    %c127_i32 = arith.constant 127 : i32
    %53 = tpu.dynamic_rotate %52 by %c127_i32 dim 0 : vector<128x128xf32>, i32 -> vector<128x128xf32>
    %cst_23 = arith.constant 0.000000e+00 : f32
    %54 = vector.shape_cast %38 : vector<128x1xi1> to vector<128x1xi1>
    %55 = vector.broadcast %54 : vector<128x1xi1> to vector<128x128xi1>
    %56 = vector.broadcast %cst_23 : f32 to vector<128x128xf32>
    %57 = arith.select %55, %53, %56 : vector<128x128xi1>, vector<128x128xf32>
    %58 = arith.addf %50, %57 : vector<128x128xf32>
    %59 = vector.broadcast %39 : vector<1x128xf32> to vector<128x128xf32>
    %60 = arith.addf %58, %59 : vector<128x128xf32>
    %cst_24 = arith.constant 0.000000e+00 : f32
    %61 = vector.broadcast %cst_24 : f32 to vector<128x128xf32>
    %62 = arith.maximumf %60, %61 : vector<128x128xf32>
    %63 = arith.truncf %62 : vector<128x128xf32> to vector<128x128xbf16>
    %c0_25 = arith.constant 0 : index
    %c128_26 = arith.constant 128 : index
    %64 = vector.load %arg3[%c0_25, %c128_26] : memref<128x384xbf16, #tpu.memory_space<vmem>>, vector<128x128xbf16>
    %cst_27 = arith.constant dense<0.000000e+00> : vector<128x128xf32>
    %65 = tpu.matmul %63, %64, %cst_27 {dimension_numbers = #tpu.dot_dimension_numbers<[1], [0], [0], [1], [0, 0, 1, 1], [], []>} : vector<128x128xbf16>, vector<128x128xbf16>, vector<128x128xf32> -> vector<128x128xf32>
    %c0_28 = arith.constant 0 : index
    %c0_29 = arith.constant 0 : index
    %66 = vector.load %arg3[%c0_28, %c0_29] : memref<128x384xbf16, #tpu.memory_space<vmem>>, vector<128x128xbf16>
    %cst_30 = arith.constant dense<0.000000e+00> : vector<128x128xf32>
    %67 = tpu.matmul %63, %66, %cst_30 {dimension_numbers = #tpu.dot_dimension_numbers<[1], [0], [0], [1], [0, 0, 1, 1], [], []>} : vector<128x128xbf16>, vector<128x128xbf16>, vector<128x128xf32> -> vector<128x128xf32>
    %c1_i32_31 = arith.constant 1 : i32
    %68 = tpu.dynamic_rotate %67 by %c1_i32_31 dim 0 : vector<128x128xf32>, i32 -> vector<128x128xf32>
    %cst_32 = arith.constant 0.000000e+00 : f32
    %69 = vector.shape_cast %20 : vector<128x1xi1> to vector<128x1xi1>
    %70 = vector.broadcast %69 : vector<128x1xi1> to vector<128x128xi1>
    %71 = vector.broadcast %cst_32 : f32 to vector<128x128xf32>
    %72 = arith.select %70, %68, %71 : vector<128x128xi1>, vector<128x128xf32>
    %73 = arith.addf %65, %72 : vector<128x128xf32>
    %c0_33 = arith.constant 0 : index
    %c256_34 = arith.constant 256 : index
    %74 = vector.load %arg3[%c0_33, %c256_34] : memref<128x384xbf16, #tpu.memory_space<vmem>>, vector<128x128xbf16>
    %cst_35 = arith.constant dense<0.000000e+00> : vector<128x128xf32>
    %75 = tpu.matmul %63, %74, %cst_35 {dimension_numbers = #tpu.dot_dimension_numbers<[1], [0], [0], [1], [0, 0, 1, 1], [], []>} : vector<128x128xbf16>, vector<128x128xbf16>, vector<128x128xf32> -> vector<128x128xf32>
    %c127_i32_36 = arith.constant 127 : i32
    %76 = tpu.dynamic_rotate %75 by %c127_i32_36 dim 0 : vector<128x128xf32>, i32 -> vector<128x128xf32>
    %cst_37 = arith.constant 0.000000e+00 : f32
    %77 = vector.shape_cast %38 : vector<128x1xi1> to vector<128x1xi1>
    %78 = vector.broadcast %77 : vector<128x1xi1> to vector<128x128xi1>
    %79 = vector.broadcast %cst_37 : f32 to vector<128x128xf32>
    %80 = arith.select %78, %76, %79 : vector<128x128xi1>, vector<128x128xf32>
    %81 = arith.addf %73, %80 : vector<128x128xf32>
    %82 = vector.broadcast %40 : vector<1x128xf32> to vector<128x128xf32>
    %83 = arith.addf %81, %82 : vector<128x128xf32>
    %84 = arith.extf %1 : vector<128x128xbf16> to vector<128x128xf32>
    %85 = arith.addf %83, %84 : vector<128x128xf32>
    %cst_38 = arith.constant 0.000000e+00 : f32
    %86 = vector.broadcast %cst_38 : f32 to vector<128x128xf32>
    %87 = arith.maximumf %85, %86 : vector<128x128xf32>
    %88 = vector.shape_cast %87 : vector<128x128xf32> to vector<8x16x128xf32>
    %c0_39 = arith.constant 0 : index
    %c0_40 = arith.constant 0 : index
    %c0_41 = arith.constant 0 : index
    %89 = vector.load %arg5[%c0_39, %c0_40, %c0_41] : memref<8x16x128xf32, #tpu.memory_space<vmem>>, vector<8x16x128xf32>
    tpu.vector_store %arg5[%c0_39, %c0_40, %c0_41], %88 {strides = array<i32>} : memref<8x16x128xf32, #tpu.memory_space<vmem>>, vector<8x16x128xf32>,
    return
  }
  func.func @transform_0(%arg0: i32) -> (i32, i32, i32) {
    %c0_i32 = arith.constant 0 : i32
    %c0_i32_0 = arith.constant 0 : i32
    %c0_i32_1 = arith.constant 0 : i32
    return %arg0, %c0_i32, %c0_i32_0 : i32, i32, i32
  }
  func.func @transform_1(%arg0: i32) -> (i32, i32) {
    %c0_i32 = arith.constant 0 : i32
    %c0_i32_0 = arith.constant 0 : i32
    %c0_i32_1 = arith.constant 0 : i32
    return %c0_i32, %c0_i32_0 : i32, i32
  }
  func.func @transform_2(%arg0: i32) -> (i32, i32) {
    %c0_i32 = arith.constant 0 : i32
    %c0_i32_0 = arith.constant 0 : i32
    %c0_i32_1 = arith.constant 0 : i32
    return %c0_i32, %c0_i32_0 : i32, i32
  }
  func.func @transform_3(%arg0: i32) -> (i32, i32) {
    %c0_i32 = arith.constant 0 : i32
    %c0_i32_0 = arith.constant 0 : i32
    %c0_i32_1 = arith.constant 0 : i32
    return %c0_i32, %c0_i32_0 : i32, i32
  }
  func.func @transform_4(%arg0: i32) -> (i32, i32, i32) {
    %c0_i32 = arith.constant 0 : i32
    %c0_i32_0 = arith.constant 0 : i32
    %c0_i32_1 = arith.constant 0 : i32
    return %arg0, %c0_i32, %c0_i32_0 : i32, i32, i32
  }
}

</mosaic_0001>

<llo_original>
// kernel: tpu_custom_call.1
$region0: #{tpu_custom_call.1}
  #allocation0 [shape = 'u32[]', space=smem, size = 0x4, offset = 0x4, fixed_abs, tag = 'smem constant byte address 0x4 - core index']
  #allocation1 [shape = 'u32[144,128]{1,0:T(1,128)}', space=vmem, size = 0x12000, scoped, tag = 'internal scratch']
  %s0 = inlined_call_operand.hbm [shape: bf16[16,16,128], index: 0, kind: input, shape index: {}]
  %s1 = inlined_call_operand.hbm [shape: bf16[128,384], index: 1, kind: input, shape index: {}]
  %s2 = inlined_call_operand.hbm [shape: bf16[128,384], index: 2, kind: input, shape index: {}]
  %s3 = inlined_call_operand.vmem [shape: f32[2,128], index: 3, kind: input, shape index: {}]
  %s4 = inlined_call_operand.hbm [shape: f32[16,16,128], index: 4, kind: output, shape index: {}]
  %s5 = sld [smem:[#allocation0]]
  $region61: #{tpu_custom_call.1} parent=0
    _
  %s7 = ssub.s32 1, %s5
  %s8 = scalar_select 0, %s7, %s5
  $region1: #{tpu_custom_call.1} parent=0
    #allocation2 [shape = 'u8[65536]{0}', space=vmem, size = 0x10000, scoped, tag = 'input window, operand 0']
    #allocation3 [shape = 's32[2]{0}', space=sflag, size = 0x8, scoped, tag = 'scoped memory for tpu_custom_call.1']
    #allocation4 [shape = 's32[2]{0}', space=sflag, size = 0x8, scoped, tag = 'scoped memory for tpu_custom_call.1']
    #allocation5 [shape = 'u8[98304]{0}', space=vmem, size = 0x18000, scoped, tag = 'input window, operand 1, single buffered']
    #allocation6 [shape = 's32[1]{0}', space=sflag, size = 0x4, scoped, tag = 'scoped memory for tpu_custom_call.1']
    #allocation7 [shape = 'u8[98304]{0}', space=vmem, size = 0x18000, scoped, tag = 'input window, operand 2, single buffered']
    #allocation8 [shape = 'u8[131072]{0}', space=vmem, size = 0x20000, scoped, tag = 'output window, operand 0']
    %9 = vsyncpa [#allocation3], 0
    %s10 = scalar_lea.sflag [#allocation3], 1
    %11 = vsyncpa %s10, 0
    %12 = vsyncpa [#allocation6], 0
    %13 = vsyncpa [#allocation4], 0
    %s14 = scalar_lea.sflag [#allocation4], 1
    %15 = vsyncpa %s14, 0
    loop: start=0, step=1, limit=4
    $region2: #{tpu_custom_call.1} parent=1 // loop_pre_header
      _
    $region3: #{tpu_custom_call.1} parent=1 // loop_header
      %s17 = sphi 0, %s21
      %p18 = scmp.ge.s32.totalorder %s17, 4
      %s27 = sphi 0, %s29
      %s30 = sphi 0, %s27
      %s31 = sphi 0, %s30
      %s47 = sphi 0, %s31
      %s51 = sphi 0, %s51
      %s53 = sphi 0, %s51
      %s54 = sphi 0, %s53
      %s68 = sphi 0, %s54
      %s72 = sphi 0, %s72
      %s74 = sphi 0, %s72
      %s75 = sphi 0, %s74
      %s89 = sphi 0, %s75
      %s93 = sphi 0, %s93
      %s95 = sphi 0, %s93
      %s96 = sphi 0, %s95
      %s110 = sphi 0, %s96
      %s116 = sphi 0, %s118
      %s119 = sphi 0, %s116
      %s120 = sphi 0, %s119
      %s136 = sphi 0, %s120
    $region4: #{tpu_custom_call.1} parent=1 // loop_header_branch
      %20 = sbr.rel (%p18) target = $region8
    $region5: #{tpu_custom_call.1} parent=1 // loop_body
      %s22 = ssub.s32 %s17, 1
      %s23 = ssub.s32 %s17, 2
      %s24 = sadd.s32 %s17, 1
      %s25 = ssub.s32 %s17, %s24
      %p26 = scmp.eq.s32.totalorder %s25, 0
      %s28 = sadd.s32 %s27, 1
      %s29 = scalar_select %p26, %s27, %s28
      %p32 = pneg %p26
      %p33 = scmp.eq.s32.totalorder %s17, 1
      %p34 = por %p32, %p33
      %p35 = scmp.ne.s32.totalorder %s27, %s30
      %p36 = scmp.eq.s32.totalorder %s17, 0
      %p37 = por %p35, %p36
      %p38 = scmp.ne.s32.totalorder %s27, %s30
      %p39 = scmp.eq.s32.totalorder %s22, 1
      %p40 = por %p38, %p39
      %p41 = scmp.ne.s32.totalorder %s30, %s31
      %p42 = scmp.eq.s32.totalorder %s22, 0
      %p43 = por %p41, %p42
      %p44 = scmp.ne.s32.totalorder %s30, %s31
      %p45 = scmp.eq.s32.totalorder %s23, 1
      %p46 = por %p44, %p45
      %p48 = scmp.ne.s32.totalorder %s31, %s47
      %p49 = scmp.eq.s32.totalorder %s23, 0
      %p50 = por %p48, %p49
      %s52 = sadd.s32 %s51, 1
      %p55 = scmp.eq.s32.totalorder %s17, 1
      %p56 = scmp.ne.s32.totalorder %s51, %s53
      %p57 = scmp.eq.s32.totalorder %s17, 0
      %p58 = por %p56, %p57
      %p59 = scmp.ne.s32.totalorder %s51, %s53
      %p60 = scmp.eq.s32.totalorder %s22, 1
      %p61 = por %p59, %p60
      %p62 = scmp.ne.s32.totalorder %s53, %s54
      %p63 = scmp.eq.s32.totalorder %s22, 0
      %p64 = por %p62, %p63
      %p65 = scmp.ne.s32.totalorder %s53, %s54
      %p66 = scmp.eq.s32.totalorder %s23, 1
      %p67 = por %p65, %p66
      %p69 = scmp.ne.s32.totalorder %s54, %s68
      %p70 = scmp.eq.s32.totalorder %s23, 0
      %p71 = por %p69, %p70
      %s73 = sadd.s32 %s72, 1
      %p76 = scmp.eq.s32.totalorder %s17, 1
      %p77 = scmp.ne.s32.totalorder %s72, %s74
      %p78 = scmp.eq.s32.totalorder %s17, 0
      %p79 = por %p77, %p78
      %p80 = scmp.ne.s32.totalorder %s72, %s74
      %p81 = scmp.eq.s32.totalorder %s22, 1
      %p82 = por %p80, %p81
      %p83 = scmp.ne.s32.totalorder %s74, %s75
      %p84 = scmp.eq.s32.totalorder %s22, 0
      %p85 = por %p83, %p84
      %p86 = scmp.ne.s32.totalorder %s74, %s75
      %p87 = scmp.eq.s32.totalorder %s23, 1
      %p88 = por %p86, %p87
      %p90 = scmp.ne.s32.totalorder %s75, %s89
      %p91 = scmp.eq.s32.totalorder %s23, 0
      %p92 = por %p90, %p91
      %s94 = sadd.s32 %s93, 1
      %p97 = scmp.eq.s32.totalorder %s17, 1
      %p98 = scmp.ne.s32.totalorder %s93, %s95
      %p99 = scmp.eq.s32.totalorder %s17, 0
      %p100 = por %p98, %p99
      %p101 = scmp.ne.s32.totalorder %s93, %s95
      %p102 = scmp.eq.s32.totalorder %s22, 1
      %p103 = por %p101, %p102
      %p104 = scmp.ne.s32.totalorder %s95, %s96
      %p105 = scmp.eq.s32.totalorder %s22, 0
      %p106 = por %p104, %p105
      %p107 = scmp.ne.s32.totalorder %s95, %s96
      %p108 = scmp.eq.s32.totalorder %s23, 1
      %p109 = por %p107, %p108
      %p111 = scmp.ne.s32.totalorder %s96, %s110
      %p112 = scmp.eq.s32.totalorder %s23, 0
      %p113 = por %p111, %p112
      %s114 = ssub.s32 %s17, %s24
      %p115 = scmp.eq.s32.totalorder %s114, 0
      %s117 = sadd.s32 %s116, 1
      %s118 = scalar_select %p115, %s116, %s117
      %p121 = pneg %p115
      %p122 = scmp.eq.s32.totalorder %s17, 1
      %p123 = por %p121, %p122
      %p124 = scmp.ne.s32.totalorder %s116, %s119
      %p125 = scmp.eq.s32.totalorder %s17, 0
      %p126 = por %p124, %p125
      %p127 = scmp.ne.s32.totalorder %s116, %s119
      %p128 = scmp.eq.s32.totalorder %s22, 1
      %p129 = por %p127, %p128
      %p130 = scmp.ne.s32.totalorder %s119, %s120
      %p131 = scmp.eq.s32.totalorder %s22, 0
      %p132 = por %p130, %p131
      %p133 = scmp.ne.s32.totalorder %s119, %s120
      %p134 = scmp.eq.s32.totalorder %s23, 1
      %p135 = por %p133, %p134
      %p137 = scmp.ne.s32.totalorder %s120, %s136
      %p138 = scmp.eq.s32.totalorder %s23, 0
      %p139 = por %p137, %p138
      %p140 = scmp.le.s32.totalorder 1, %s17
      %p141 = scmp.lt.s32.totalorder %s17, 3
      %p142 = pnand %p140, %p141
      %p143 = pneg %p142
      // Predicated region
      $region9: #{tpu_custom_call.1} parent=5 // pred_check
        _
      $region10: #{tpu_custom_call.1} parent=5 // pred_check_branch
        %145 = sbr.rel (%p142) target = $region12
      $region11: #{tpu_custom_call.1} parent=5 // pred_region
        %s146 = ssub.s32 %s17, 1
        // Predicated region
        $region13: #{tpu_custom_call.1} parent=11 // pred_check
          %p147 = pneg %p64
        $region14: #{tpu_custom_call.1} parent=11 // pred_check_branch
          %149 = sbr.rel (%p147) target = $region16
        $region15: #{tpu_custom_call.1} parent=11 // pred_region
          %s151 = ssub.s32 3072, 3072
          %152 = vsyncadd [#allocation6], %s151
          %s153 = sshll.u32 [#allocation5], 4
          %s154 = int_to_ptr.vmem [resolvable:$true] %s153
          %159 = dma.hbm_to_vmem [thread:$0]  %s1, 3072, %s154, [#allocation6], 192, 192, 12
        $region16: #{tpu_custom_call.1} parent=11 // pred_fallthru
          _
        // Predicated region
        $region17: #{tpu_custom_call.1} parent=11 // pred_check
          %p160 = pneg %p85
        $region18: #{tpu_custom_call.1} parent=11 // pred_check_branch
          %162 = sbr.rel (%p160) target = $region20
        $region19: #{tpu_custom_call.1} parent=11 // pred_region
          %s164 = ssub.s32 3072, 3072
          %165 = vsyncadd [#allocation6], %s164
          %s166 = sshll.u32 [#allocation7], 4
          %s167 = int_to_ptr.vmem [resolvable:$true] %s166
          %172 = dma.hbm_to_vmem [thread:$0]  %s2, 3072, %s167, [#allocation6], 192, 192, 12
        $region20: #{tpu_custom_call.1} parent=11 // pred_fallthru
          _
        // Predicated region
        $region21: #{tpu_custom_call.1} parent=11 // pred_check
          %p173 = pneg %p106
        $region22: #{tpu_custom_call.1} parent=11 // pred_check_branch
          %175 = sbr.rel (%p173) target = $region24
        $region23: #{tpu_custom_call.1} parent=11 // pred_region
          _
        $region24: #{tpu_custom_call.1} parent=11 // pred_fallthru
          _
      $region12: #{tpu_custom_call.1} parent=5 // pred_fallthru
        _
      %p176 = scmp.lt.s32.totalorder %s17, 2
      // Predicated region
      $region25: #{tpu_custom_call.1} parent=5 // pred_check
        %p177 = pneg %p176
      $region26: #{tpu_custom_call.1} parent=5 // pred_check_branch
        %179 = sbr.rel (%p177) target = $region28
      $region27: #{tpu_custom_call.1} parent=5 // pred_region
        // Predicated region
        $region29: #{tpu_custom_call.1} parent=27 // pred_check
          %p180 = pneg %p37
        $region30: #{tpu_custom_call.1} parent=27 // pred_check_branch
          %182 = sbr.rel (%p180) target = $region32
        $region31: #{tpu_custom_call.1} parent=27 // pred_region
          %s183 = sand.u32 %s27, 1
          %s184 = scalar_lea.sflag [#allocation3], %s183
          %s185 = sand.u32 %s27, 1
          %s186 = smul.addr %s185, 64
          %s187 = scalar_lea.vmem [#allocation2], %s186
          %s188 = smul.u32 8, %s17
          %s190 = ssub.s32 1024, 1024
          %191 = vsyncadd %s184, %s190
          %s192 = smul.addr %s188, 2
          %s193 = smul.addr %s192, 64
          %s194 = scalar_lea.hbm %s0, %s193
          %s195 = sshll.u32 %s187, 4
          %s196 = int_to_ptr.vmem [resolvable:$true] %s195
          %201 = dma.hbm_to_vmem [thread:$0]  %s194, 1024, %s196, %s184, 64, 64, 4
        $region32: #{tpu_custom_call.1} parent=27 // pred_fallthru
          _
      $region28: #{tpu_custom_call.1} parent=5 // pred_fallthru
        _
      %p202 = scmp.le.s32.totalorder 1, %s17
      %p203 = scmp.lt.s32.totalorder %s17, 3
      %p204 = pnand %p202, %p203
      %p205 = pneg %p204
      // Predicated region
      $region33: #{tpu_custom_call.1} parent=5 // pred_check
        _
      $region34: #{tpu_custom_call.1} parent=5 // pred_check_branch
        %207 = sbr.rel (%p204) target = $region36
      $region35: #{tpu_custom_call.1} parent=5 // pred_region
        %s208 = ssub.s32 %s17, 1
        %s209 = sand.u32 %s30, 1
        %s210 = scalar_lea.sflag [#allocation3], %s209
        %s211 = sand.u32 %s30, 1
        %s212 = smul.addr %s211, 64
        %s213 = scalar_lea.vmem [#allocation2], %s212
        // Predicated region
        $region37: #{tpu_custom_call.1} parent=35 // pred_check
          %p214 = pneg %p43
        $region38: #{tpu_custom_call.1} parent=35 // pred_check_branch
          %216 = sbr.rel (%p214) target = $region40
        $region39: #{tpu_custom_call.1} parent=35 // pred_region
          %217 = dma.done %s210, 1024
        $region40: #{tpu_custom_call.1} parent=35 // pred_fallthru
          _
        // Predicated region
        $region41: #{tpu_custom_call.1} parent=35 // pred_check
          %p218 = pneg %p64
        $region42: #{tpu_custom_call.1} parent=35 // pred_check_branch
          %220 = sbr.rel (%p218) target = $region44
        $region43: #{tpu_custom_call.1} parent=35 // pred_region
          %221 = dma.done [#allocation6], 3072
        $region44: #{tpu_custom_call.1} parent=35 // pred_fallthru
          _
        // Predicated region
        $region45: #{tpu_custom_call.1} parent=35 // pred_check
          %p222 = pneg %p85
        $region46: #{tpu_custom_call.1} parent=35 // pred_check_branch
          %224 = sbr.rel (%p222) target = $region48
        $region47: #{tpu_custom_call.1} parent=35 // pred_region
          %225 = dma.done [#allocation6], 3072
        $region48: #{tpu_custom_call.1} parent=35 // pred_fallthru
          _
        %s226 = sand.u32 %s30, 1
        %s227 = scalar_lea.sflag [#allocation3], %s226
        %s228 = sand.u32 %s30, 1
        %s229 = smul.addr %s228, 64
        %s230 = scalar_lea.vmem [#allocation2], %s229
        %p231 = pneg %p43
        %p232 = pneg %p40
        %p233 = pneg %p64
        %p234 = pneg %p61
        %p235 = pneg %p85
        %p236 = pneg %p82
        %p237 = pneg %p106
        %p238 = pneg %p103
        %p239 = pneg %p132
        %p240 = pneg %p129
        %s241 = sand.u32 %s119, 1
        %s242 = scalar_lea.sflag [#allocation4], %s241
        %s243 = sand.u32 %s119, 1
        %s244 = smul.addr %s243, 128
        %s245 = scalar_lea.vmem [#allocation8], %s244
        %s246 = smul.u32 8, %s22
        %s247 = smul.u32 8, %s22
        %v249 = vld [vmem:[%s213] sm:$0xf]
        %v250 = vld [vmem:[%s213 + $0x4] sm:$0xf]
        %v251 = vld [vmem:[%s213 + $0x8] sm:$0xf]
        %v252 = vld [vmem:[%s213 + $0xc] sm:$0xf]
        %v253 = vld [vmem:[%s213 + $0x10] sm:$0xf]
        %v254 = vld [vmem:[%s213 + $0x14] sm:$0xf]
        %v255 = vld [vmem:[%s213 + $0x18] sm:$0xf]
        %v256 = vld [vmem:[%s213 + $0x1c] sm:$0xf]
        %v257 = vld [vmem:[%s213 + $0x20] sm:$0xf]
        %v258 = vld [vmem:[%s213 + $0x24] sm:$0xf]
        %v259 = vld [vmem:[%s213 + $0x28] sm:$0xf]
        %v260 = vld [vmem:[%s213 + $0x2c] sm:$0xf]
        %v261 = vld [vmem:[%s213 + $0x30] sm:$0xf]
        %v262 = vld [vmem:[%s213 + $0x34] sm:$0xf]
        %v263 = vld [vmem:[%s213 + $0x38] sm:$0xf]
        %v264 = vld [vmem:[%s213 + $0x3c] sm:$0xf]
        %v265 = vlaneseq
        %v266 = vshrl.u32 %v265, 7
        %v267 = vadd.s32 %v266, 8
        %v268 = vadd.s32 %v266, 16
        %v269 = vadd.s32 %v266, 24
        %v270 = vadd.s32 %v266, 32
        %v271 = vadd.s32 %v266, 40
        %v272 = vadd.s32 %v266, 48
        %v273 = vadd.s32 %v266, 56
        %v274 = vadd.s32 %v266, 64
        %v275 = vadd.s32 %v266, 72
        %v276 = vadd.s32 %v266, 80
        %v277 = vadd.s32 %v266, 88
        %v278 = vadd.s32 %v266, 96
        %v279 = vadd.s32 %v266, 104
        %v280 = vadd.s32 %v266, 112
        %v281 = vadd.s32 %v266, 120
        %vm282 = vcmp.lt.s32.totalorder %v266, 0
        %v283 = vsub.s32 0, %v266
        %v284 = vsel %vm282, %v283, %v266
        %v285 = vshrl.u32 %v284, 4
        %v286 = vand.u32 %v284, 15
        %v287 = vsub.s32 0, %v286
        %v288 = vsel %vm282, %v287, %v286
        %vm289 = vcmp.lt.s32.totalorder %v267, 0
        %v290 = vsub.s32 0, %v267
        %v291 = vsel %vm289, %v290, %v267
        %v292 = vshrl.u32 %v291, 4
        %v293 = vand.u32 %v291, 15
        %v294 = vsub.s32 0, %v293
        %v295 = vsel %vm289, %v294, %v293
        %vm296 = vcmp.lt.s32.totalorder %v268, 0
        %v297 = vsub.s32 0, %v268
        %v298 = vsel %vm296, %v297, %v268
        %v299 = vshrl.u32 %v298, 4
        %v300 = vand.u32 %v298, 15
        %v301 = vsub.s32 0, %v300
        %v302 = vsel %vm296, %v301, %v300
        %vm303 = vcmp.lt.s32.totalorder %v269, 0
        %v304 = vsub.s32 0, %v269
        %v305 = vsel %vm303, %v304, %v269
        %v306 = vshrl.u32 %v305, 4
        %v307 = vand.u32 %v305, 15
        %v308 = vsub.s32 0, %v307
        %v309 = vsel %vm303, %v308, %v307
        %vm310 = vcmp.lt.s32.totalorder %v270, 0
        %v311 = vsub.s32 0, %v270
        %v312 = vsel %vm310, %v311, %v270
        %v313 = vshrl.u32 %v312, 4
        %v314 = vand.u32 %v312, 15
        %v315 = vsub.s32 0, %v314
        %v316 = vsel %vm310, %v315, %v314
        %vm317 = vcmp.lt.s32.totalorder %v271, 0
        %v318 = vsub.s32 0, %v271
        %v319 = vsel %vm317, %v318, %v271
        %v320 = vshrl.u32 %v319, 4
        %v321 = vand.u32 %v319, 15
        %v322 = vsub.s32 0, %v321
        %v323 = vsel %vm317, %v322, %v321
        %vm324 = vcmp.lt.s32.totalorder %v272, 0
        %v325 = vsub.s32 0, %v272
        %v326 = vsel %vm324, %v325, %v272
        %v327 = vshrl.u32 %v326, 4
        %v328 = vand.u32 %v326, 15
        %v329 = vsub.s32 0, %v328
        %v330 = vsel %vm324, %v329, %v328
        %vm331 = vcmp.lt.s32.totalorder %v273, 0
        %v332 = vsub.s32 0, %v273
        %v333 = vsel %vm331, %v332, %v273
        %v334 = vshrl.u32 %v333, 4
        %v335 = vand.u32 %v333, 15
        %v336 = vsub.s32 0, %v335
        %v337 = vsel %vm331, %v336, %v335
        %vm338 = vcmp.lt.s32.totalorder %v274, 0
        %v339 = vsub.s32 0, %v274
        %v340 = vsel %vm338, %v339, %v274
        %v341 = vshrl.u32 %v340, 4
        %v342 = vand.u32 %v340, 15
        %v343 = vsub.s32 0, %v342
        %v344 = vsel %vm338, %v343, %v342
        %vm345 = vcmp.lt.s32.totalorder %v275, 0
        %v346 = vsub.s32 0, %v275
        %v347 = vsel %vm345, %v346, %v275
        %v348 = vshrl.u32 %v347, 4
        %v349 = vand.u32 %v347, 15
        %v350 = vsub.s32 0, %v349
        %v351 = vsel %vm345, %v350, %v349
        %vm352 = vcmp.lt.s32.totalorder %v276, 0
        %v353 = vsub.s32 0, %v276
        %v354 = vsel %vm352, %v353, %v276
        %v355 = vshrl.u32 %v354, 4
        %v356 = vand.u32 %v354, 15
        %v357 = vsub.s32 0, %v356
        %v358 = vsel %vm352, %v357, %v356
        %vm359 = vcmp.lt.s32.totalorder %v277, 0
        %v360 = vsub.s32 0, %v277
        %v361 = vsel %vm359, %v360, %v277
        %v362 = vshrl.u32 %v361, 4
        %v363 = vand.u32 %v361, 15
        %v364 = vsub.s32 0, %v363
        %v365 = vsel %vm359, %v364, %v363
        %vm366 = vcmp.lt.s32.totalorder %v278, 0
        %v367 = vsub.s32 0, %v278
        %v368 = vsel %vm366, %v367, %v278
        %v369 = vshrl.u32 %v368, 4
        %v370 = vand.u32 %v368, 15
        %v371 = vsub.s32 0, %v370
        %v372 = vsel %vm366, %v371, %v370
        %vm373 = vcmp.lt.s32.totalorder %v279, 0
        %v374 = vsub.s32 0, %v279
        %v375 = vsel %vm373, %v374, %v279
        %v376 = vshrl.u32 %v375, 4
        %v377 = vand.u32 %v375, 15
        %v378 = vsub.s32 0, %v377
        %v379 = vsel %vm373, %v378, %v377
        %vm380 = vcmp.lt.s32.totalorder %v280, 0
        %v381 = vsub.s32 0, %v280
        %v382 = vsel %vm380, %v381, %v280
        %v383 = vshrl.u32 %v382, 4
        %v384 = vand.u32 %v382, 15
        %v385 = vsub.s32 0, %v384
        %v386 = vsel %vm380, %v385, %v384
        %vm387 = vcmp.lt.s32.totalorder %v281, 0
        %v388 = vsub.s32 0, %v281
        %v389 = vsel %vm387, %v388, %v281
        %v390 = vshrl.u32 %v389, 4
        %v391 = vand.u32 %v389, 15
        %v392 = vsub.s32 0, %v391
        %v393 = vsel %vm387, %v392, %v391
        %vm394 = vcmp.ne.s32.totalorder %v288, 0
        %vm395 = vcmp.ne.s32.totalorder %v295, 0
        %vm396 = vcmp.ne.s32.totalorder %v302, 0
        %vm397 = vcmp.ne.s32.totalorder %v309, 0
        %vm398 = vcmp.ne.s32.totalorder %v316, 0
        %vm399 = vcmp.ne.s32.totalorder %v323, 0
        %vm400 = vcmp.ne.s32.totalorder %v330, 0
        %vm401 = vcmp.ne.s32.totalorder %v337, 0
        %vm402 = vcmp.ne.s32.totalorder %v344, 0
        %vm403 = vcmp.ne.s32.totalorder %v351, 0
        %vm404 = vcmp.ne.s32.totalorder %v358, 0
        %vm405 = vcmp.ne.s32.totalorder %v365, 0
        %vm406 = vcmp.ne.s32.totalorder %v372, 0
        %vm407 = vcmp.ne.s32.totalorder %v379, 0
        %vm408 = vcmp.ne.s32.totalorder %v386, 0
        %vm409 = vcmp.ne.s32.totalorder %v393, 0
        %vm410 = vcmp.lt.s32.totalorder %v288, 0
        %vm411 = vcmp.lt.s32.totalorder %v295, 0
        %vm412 = vcmp.lt.s32.totalorder %v302, 0
        %vm413 = vcmp.lt.s32.totalorder %v309, 0
        %vm414 = vcmp.lt.s32.totalorder %v316, 0
        %vm415 = vcmp.lt.s32.totalorder %v323, 0
        %vm416 = vcmp.lt.s32.totalorder %v330, 0
        %vm417 = vcmp.lt.s32.totalorder %v337, 0
        %vm418 = vcmp.lt.s32.totalorder %v344, 0
        %vm419 = vcmp.lt.s32.totalorder %v351, 0
        %vm420 = vcmp.lt.s32.totalorder %v358, 0
        %vm421 = vcmp.lt.s32.totalorder %v365, 0
        %vm422 = vcmp.lt.s32.totalorder %v372, 0
        %vm423 = vcmp.lt.s32.totalorder %v379, 0
        %vm424 = vcmp.lt.s32.totalorder %v386, 0
        %vm425 = vcmp.lt.s32.totalorder %v393, 0
        %vm426 = vmand %vm410, %vm394
        %vm427 = vmand %vm411, %vm395
        %vm428 = vmand %vm412, %vm396
        %vm429 = vmand %vm413, %vm397
        %vm430 = vmand %vm414, %vm398
        %vm431 = vmand %vm415, %vm399
        %vm432 = vmand %vm416, %vm400
        %vm433 = vmand %vm417, %vm401
        %vm434 = vmand %vm418, %vm402
        %vm435 = vmand %vm419, %vm403
        %vm436 = vmand %vm420, %vm404
        %vm437 = vmand %vm421, %vm405
        %vm438 = vmand %vm422, %vm406
        %vm439 = vmand %vm423, %vm407
        %vm440 = vmand %vm424, %vm408
        %vm441 = vmand %vm425, %vm409
        %v442 = vadd.s32 %v288, 16
        %v443 = vadd.s32 %v295, 16
        %v444 = vadd.s32 %v302, 16
        %v445 = vadd.s32 %v309, 16
        %v446 = vadd.s32 %v316, 16
        %v447 = vadd.s32 %v323, 16
        %v448 = vadd.s32 %v330, 16
        %v449 = vadd.s32 %v337, 16
        %v450 = vadd.s32 %v344, 16
        %v451 = vadd.s32 %v351, 16
        %v452 = vadd.s32 %v358, 16
        %v453 = vadd.s32 %v365, 16
        %v454 = vadd.s32 %v372, 16
        %v455 = vadd.s32 %v379, 16
        %v456 = vadd.s32 %v386, 16
        %v457 = vadd.s32 %v393, 16
        %v458 = vsel %vm426, %v442, %v288
        %v459 = vsel %vm427, %v443, %v295
        %v460 = vsel %vm428, %v444, %v302
        %v461 = vsel %vm429, %v445, %v309
        %v462 = vsel %vm430, %v446, %v316
        %v463 = vsel %vm431, %v447, %v323
        %v464 = vsel %vm432, %v448, %v330
        %v465 = vsel %vm433, %v449, %v337
        %v466 = vsel %vm434, %v450, %v344
        %v467 = vsel %vm435, %v451, %v351
        %v468 = vsel %vm436, %v452, %v358
        %v469 = vsel %vm437, %v453, %v365
        %v470 = vsel %vm438, %v454, %v372
        %v471 = vsel %vm439, %v455, %v379
        %v472 = vsel %vm440, %v456, %v386
        %v473 = vsel %vm441, %v457, %v393
        %vm474 = vcmp.ne.s32.totalorder %v458, 0
        %vm475 = vcmp.ne.s32.totalorder %v459, 0
        %vm476 = vcmp.ne.s32.totalorder %v460, 0
        %vm477 = vcmp.ne.s32.totalorder %v461, 0
        %vm478 = vcmp.ne.s32.totalorder %v462, 0
        %vm479 = vcmp.ne.s32.totalorder %v463, 0
        %vm480 = vcmp.ne.s32.totalorder %v464, 0
        %vm481 = vcmp.ne.s32.totalorder %v465, 0
        %vm482 = vcmp.ne.s32.totalorder %v466, 0
        %vm483 = vcmp.ne.s32.totalorder %v467, 0
        %vm484 = vcmp.ne.s32.totalorder %v468, 0
        %vm485 = vcmp.ne.s32.totalorder %v469, 0
        %vm486 = vcmp.ne.s32.totalorder %v470, 0
        %vm487 = vcmp.ne.s32.totalorder %v471, 0
        %vm488 = vcmp.ne.s32.totalorder %v472, 0
        %vm489 = vcmp.ne.s32.totalorder %v473, 0
        %vm490 = vcmp.ne.s32.totalorder %v458, 15
        %vm491 = vcmp.ne.s32.totalorder %v459, 15
        %vm492 = vcmp.ne.s32.totalorder %v460, 15
        %vm493 = vcmp.ne.s32.totalorder %v461, 15
        %vm494 = vcmp.ne.s32.totalorder %v462, 15
        %vm495 = vcmp.ne.s32.totalorder %v463, 15
        %vm496 = vcmp.ne.s32.totalorder %v464, 15
        %vm497 = vcmp.ne.s32.totalorder %v465, 15
        %vm498 = vcmp.ne.s32.totalorder %v466, 15
        %vm499 = vcmp.ne.s32.totalorder %v467, 15
        %vm500 = vcmp.ne.s32.totalorder %v468, 15
        %vm501 = vcmp.ne.s32.totalorder %v469, 15
        %vm502 = vcmp.ne.s32.totalorder %v470, 15
        %vm503 = vcmp.ne.s32.totalorder %v471, 15
        %vm504 = vcmp.ne.s32.totalorder %v472, 15
        %vm505 = vcmp.ne.s32.totalorder %v473, 15
        %v506 = vld [vmem:[%s3] sm:$0x1]
        %v507 = vld [vmem:[%s3 + $0x1] sm:$0x1]
        %v508 = vld [vmem:[#allocation5 + $0x4] sm:$0xf]
        %v509 = vld [vmem:[#allocation5 + $0x10] sm:$0xf]
        %v510 = vld [vmem:[#allocation5 + $0x1c] sm:$0xf]
        %v511 = vld [vmem:[#allocation5 + $0x28] sm:$0xf]
        %v512 = vld [vmem:[#allocation5 + $0x34] sm:$0xf]
        %v513 = vld [vmem:[#allocation5 + $0x40] sm:$0xf]
        %v514 = vld [vmem:[#allocation5 + $0x4c] sm:$0xf]
        %v515 = vld [vmem:[#allocation5 + $0x58] sm:$0xf]
        %v516 = vld [vmem:[#allocation5 + $0x64] sm:$0xf]
        %v517 = vld [vmem:[#allocation5 + $0x70] sm:$0xf]
        %v518 = vld [vmem:[#allocation5 + $0x7c] sm:$0xf]
        %v519 = vld [vmem:[#allocation5 + $0x88] sm:$0xf]
        %v520 = vld [vmem:[#allocation5 + $0x94] sm:$0xf]
        %v521 = vld [vmem:[#allocation5 + $0xa0] sm:$0xf]
        %v522 = vld [vmem:[#allocation5 + $0xac] sm:$0xf]
        %v523 = vld [vmem:[#allocation5 + $0xb8] sm:$0xf]
        %v524 = vld [vmem:[#allocation5] sm:$0xf]
        %v525 = vld [vmem:[#allocation5 + $0xc] sm:$0xf]
        %v526 = vld [vmem:[#allocation5 + $0x18] sm:$0xf]
        %v527 = vld [vmem:[#allocation5 + $0x24] sm:$0xf]
        %v528 = vld [vmem:[#allocation5 + $0x30] sm:$0xf]
        %v529 = vld [vmem:[#allocation5 + $0x3c] sm:$0xf]
        %v530 = vld [vmem:[#allocation5 + $0x48] sm:$0xf]
        %v531 = vld [vmem:[#allocation5 + $0x54] sm:$0xf]
        %v532 = vld [vmem:[#allocation5 + $0x60] sm:$0xf]
        %v533 = vld [vmem:[#allocation5 + $0x6c] sm:$0xf]
        %v534 = vld [vmem:[#allocation5 + $0x78] sm:$0xf]
        %v535 = vld [vmem:[#allocation5 + $0x84] sm:$0xf]
        %v536 = vld [vmem:[#allocation5 + $0x90] sm:$0xf]
        %v537 = vld [vmem:[#allocation5 + $0x9c] sm:$0xf]
        %v538 = vld [vmem:[#allocation5 + $0xa8] sm:$0xf]
        %v539 = vld [vmem:[#allocation5 + $0xb4] sm:$0xf]
        %v556 = vunpack.c.l.b16 %v249
        %v557 = vunpack.c.l.b16 %v250
        %v558 = vunpack.c.l.b16 %v251
        %v559 = vunpack.c.l.b16 %v252
        %v560 = vunpack.c.l.b16 %v253
        %v561 = vunpack.c.l.b16 %v254
        %v562 = vunpack.c.l.b16 %v255
        %v563 = vunpack.c.l.b16 %v256
        %v564 = vunpack.c.l.b16 %v257
        %v565 = vunpack.c.l.b16 %v258
        %v566 = vunpack.c.l.b16 %v259
        %v567 = vunpack.c.l.b16 %v260
        %v568 = vunpack.c.l.b16 %v261
        %v569 = vunpack.c.l.b16 %v262
        %v570 = vunpack.c.l.b16 %v263
        %v571 = vunpack.c.l.b16 %v264
        %v572 = vpack.c.b16 %v557, %v556
        %v573 = vpack.c.b16 %v559, %v558
        %v574 = vpack.c.b16 %v561, %v560
        %v575 = vpack.c.b16 %v563, %v562
        %v576 = vpack.c.b16 %v565, %v564
        %v577 = vpack.c.b16 %v567, %v566
        %v578 = vpack.c.b16 %v569, %v568
        %v579 = vpack.c.b16 %v571, %v570
        %v604 = vunpack.c.l.b16 %v524
        %v605 = vunpack.c.l.b16 %v525
        %v606 = vunpack.c.l.b16 %v526
        %v607 = vunpack.c.l.b16 %v527
        %v608 = vunpack.c.l.b16 %v528
        %v609 = vunpack.c.l.b16 %v529
        %v610 = vunpack.c.l.b16 %v530
        %v611 = vunpack.c.l.b16 %v531
        %v612 = vunpack.c.l.b16 %v532
        %v613 = vunpack.c.l.b16 %v533
        %v614 = vunpack.c.l.b16 %v534
        %v615 = vunpack.c.l.b16 %v535
        %v616 = vunpack.c.l.b16 %v536
        %v617 = vunpack.c.l.b16 %v537
        %v618 = vunpack.c.l.b16 %v538
        %v619 = vunpack.c.l.b16 %v539
        %v620 = vpack.c.b16 %v605, %v604
        %v621 = vpack.c.b16 %v607, %v606
        %v622 = vpack.c.b16 %v609, %v608
        %v623 = vpack.c.b16 %v611, %v610
        %v624 = vpack.c.b16 %v613, %v612
        %v625 = vpack.c.b16 %v615, %v614
        %v626 = vpack.c.b16 %v617, %v616
        %v627 = vpack.c.b16 %v619, %v618
        %636 = vmatprep.subr.bf16.mxu0 0
        %637 = vmatpush1.bf16.msra.mxu0 %v620
        %638 = vmatprep.subr.bf16.mxu0 0
        %639 = vmatpush1.bf16.msra.mxu0 %v621
        %640 = vmatprep.subr.bf16.mxu0 0
        %641 = vmatpush1.bf16.msra.mxu0 %v622
        %642 = vmatprep.subr.bf16.mxu0 0
        %643 = vmatpush1.bf16.msra.mxu0 %v623
        %644 = vmatprep.subr.bf16.mxu0 0
        %645 = vmatpush1.bf16.msra.mxu0 %v624
        %646 = vmatprep.subr.bf16.mxu0 0
        %647 = vmatpush1.bf16.msra.mxu0 %v625
        %648 = vmatprep.subr.bf16.mxu0 0
        %649 = vmatpush1.bf16.msra.mxu0 %v626
        %650 = vmatprep.subr.bf16.mxu0 0
        %651 = vmatpush1.bf16.msra.mxu0 %v627
        %652 = vmatprep.subr.bf16.mxu0 0
        %653 = vmatpush1.bf16.msra.mxu0 0
        %654 = vmatprep.subr.bf16.mxu0 0
        %655 = vmatpush1.bf16.msra.mxu0 0
        %656 = vmatprep.subr.bf16.mxu0 0
        %657 = vmatpush1.bf16.msra.mxu0 0
        %658 = vmatprep.subr.bf16.mxu0 0
        %659 = vmatpush1.bf16.msra.mxu0 0
        %660 = vmatprep.subr.bf16.mxu0 0
        %661 = vmatpush1.bf16.msra.mxu0 0
        %662 = vmatprep.subr.bf16.mxu0 0
        %663 = vmatpush1.bf16.msra.mxu0 0
        %664 = vmatprep.subr.bf16.mxu0 0
        %665 = vmatpush1.bf16.msra.mxu0 0
        %666 = vmatprep.subr.bf16.mxu0 0
        %667 = vmatpush1.bf16.msra.mxu0 0
        %668 = vmatprep.mubr.bf16.mxu0 0
        %669 = vmatmul.mubr.bf16.gmra.mrb[0].mxu0 %v572
        %v670 = vpop.f32.mrb[0].mxu0
        %v671 = vadd.f32 0.0, %v670
        %v672 = vpop.f32.mrb[0].mxu0
        %v673 = vpop.f32.mrb[0].mxu0
        %v674 = vadd.f32 0.0, %v673
        %v675 = vpop.f32.mrb[0].mxu0
        %676 = vmatprep.mubr.bf16.mxu0 0
        %677 = vmatmul.mubr.bf16.gmra.mrb[0].mxu0 %v573
        %v678 = vpop.f32.mrb[0].mxu0
        %v679 = vadd.f32 0.0, %v678
        %v680 = vpop.f32.mrb[0].mxu0
        %v681 = vpop.f32.mrb[0].mxu0
        %v682 = vadd.f32 0.0, %v681
        %v683 = vpop.f32.mrb[0].mxu0
        %684 = vmatprep.mubr.bf16.mxu0 0
        %685 = vmatmul.mubr.bf16.gmra.mrb[0].mxu0 %v574
        %v686 = vpop.f32.mrb[0].mxu0
        %v687 = vadd.f32 0.0, %v686
        %v688 = vpop.f32.mrb[0].mxu0
        %v689 = vpop.f32.mrb[0].mxu0
        %v690 = vadd.f32 0.0, %v689
        %v691 = vpop.f32.mrb[0].mxu0
        %692 = vmatprep.mubr.bf16.mxu0 0
        %693 = vmatmul.mubr.bf16.gmra.mrb[0].mxu0 %v575
        %v694 = vpop.f32.mrb[0].mxu0
        %v695 = vadd.f32 0.0, %v694
        %v696 = vpop.f32.mrb[0].mxu0
        %v697 = vpop.f32.mrb[0].mxu0
        %v698 = vadd.f32 0.0, %v697
        %v699 = vpop.f32.mrb[0].mxu0
        %700 = vmatprep.mubr.bf16.mxu0 0
        %701 = vmatmul.mubr.bf16.gmra.mrb[0].mxu0 %v576
        %v702 = vpop.f32.mrb[0].mxu0
        %v703 = vadd.f32 0.0, %v702
        %v704 = vpop.f32.mrb[0].mxu0
        %v705 = vpop.f32.mrb[0].mxu0
        %v706 = vadd.f32 0.0, %v705
        %v707 = vpop.f32.mrb[0].mxu0
        %708 = vmatprep.mubr.bf16.mxu0 0
        %709 = vmatmul.mubr.bf16.gmra.mrb[0].mxu0 %v577
        %v710 = vpop.f32.mrb[0].mxu0
        %v711 = vadd.f32 0.0, %v710
        %v712 = vpop.f32.mrb[0].mxu0
        %v713 = vpop.f32.mrb[0].mxu0
        %v714 = vadd.f32 0.0, %v713
        %v715 = vpop.f32.mrb[0].mxu0
        %716 = vmatprep.mubr.bf16.mxu0 0
        %717 = vmatmul.mubr.bf16.gmra.mrb[0].mxu0 %v578
        %v718 = vpop.f32.mrb[0].mxu0
        %v719 = vadd.f32 0.0, %v718
        %v720 = vpop.f32.mrb[0].mxu0
        %v721 = vpop.f32.mrb[0].mxu0
        %v722 = vadd.f32 0.0, %v721
        %v723 = vpop.f32.mrb[0].mxu0
        %724 = vmatprep.mubr.bf16.mxu0 0
        %725 = vmatmul.mubr.bf16.gmra.mrb[0].mxu0 %v579
        %v726 = vpop.f32.mrb[0].mxu0
        %v727 = vadd.f32 0.0, %v726
        %v728 = vpop.f32.mrb[0].mxu0
        %v729 = vpop.f32.mrb[0].mxu0
        %v730 = vadd.f32 0.0, %v729
        %v731 = vpop.f32.mrb[0].mxu0
        %732 = vdwg.mxu0
        %v733 = vrot.slane %v671, 7
        %v734 = vrot.slane %v674, 7
        %v735 = vrot.slane %v679, 7
        %v736 = vrot.slane %v682, 7
        %v737 = vrot.slane %v687, 7
        %v738 = vrot.slane %v690, 7
        %v739 = vrot.slane %v695, 7
        %v740 = vrot.slane %v698, 7
        %v741 = vrot.slane %v703, 7
        %v742 = vrot.slane %v706, 7
        %v743 = vrot.slane %v711, 7
        %v744 = vrot.slane %v714, 7
        %v745 = vrot.slane %v719, 7
        %v746 = vrot.slane %v722, 7
        %v747 = vrot.slane %v727, 7
        %v748 = vrot.slane %v730, 7
        %vm749 = vcmp.lt.s32.totalorder %v266, 1
        %v750 = vsel %vm749, %v747, %v748
        %v751 = vsel %vm749, %v746, %v747
        %v752 = vsel %vm749, %v745, %v746
        %v753 = vsel %vm749, %v744, %v745
        %v754 = vsel %vm749, %v743, %v744
        %v755 = vsel %vm749, %v742, %v743
        %v756 = vsel %vm749, %v741, %v742
        %v757 = vsel %vm749, %v740, %v741
        %v758 = vsel %vm749, %v739, %v740
        %v759 = vsel %vm749, %v738, %v739
        %v760 = vsel %vm749, %v737, %v738
        %v761 = vsel %vm749, %v736, %v737
        %v762 = vsel %vm749, %v735, %v736
        %v763 = vsel %vm749, %v734, %v735
        %v764 = vsel %vm749, %v733, %v734
        %v765 = vsel %vm749, %v748, %v733
        %v766 = vsel %vm474, 1, 0
        %v767 = vsel %vm475, 1, 0
        %v768 = vsel %vm476, 1, 0
        %v769 = vsel %vm477, 1, 0
        %v770 = vsel %vm478, 1, 0
        %v771 = vsel %vm479, 1, 0
        %v772 = vsel %vm480, 1, 0
        %v773 = vsel %vm481, 1, 0
        %v774 = vsel %vm482, 1, 0
        %v775 = vsel %vm483, 1, 0
        %v776 = vsel %vm484, 1, 0
        %v777 = vsel %vm485, 1, 0
        %v778 = vsel %vm486, 1, 0
        %v779 = vsel %vm487, 1, 0
        %v780 = vsel %vm488, 1, 0
        %v781 = vsel %vm489, 1, 0
        %vm782 = vcmp.eq.s32.totalorder %v766, 1
        %vm783 = vcmp.eq.s32.totalorder %v767, 1
        %vm784 = vcmp.eq.s32.totalorder %v768, 1
        %vm785 = vcmp.eq.s32.totalorder %v769, 1
        %vm786 = vcmp.eq.s32.totalorder %v770, 1
        %vm787 = vcmp.eq.s32.totalorder %v771, 1
        %vm788 = vcmp.eq.s32.totalorder %v772, 1
        %vm789 = vcmp.eq.s32.totalorder %v773, 1
        %vm790 = vcmp.eq.s32.totalorder %v774, 1
        %vm791 = vcmp.eq.s32.totalorder %v775, 1
        %vm792 = vcmp.eq.s32.totalorder %v776, 1
        %vm793 = vcmp.eq.s32.totalorder %v777, 1
        %vm794 = vcmp.eq.s32.totalorder %v778, 1
        %vm795 = vcmp.eq.s32.totalorder %v779, 1
        %vm796 = vcmp.eq.s32.totalorder %v780, 1
        %vm797 = vcmp.eq.s32.totalorder %v781, 1
        %v798 = vsel %vm782, %v765, 0.0
        %v799 = vsel %vm783, %v764, 0.0
        %v800 = vsel %vm784, %v763, 0.0
        %v801 = vsel %vm785, %v762, 0.0
        %v802 = vsel %vm786, %v761, 0.0
        %v803 = vsel %vm787, %v760, 0.0
        %v804 = vsel %vm788, %v759, 0.0
        %v805 = vsel %vm789, %v758, 0.0
        %v806 = vsel %vm790, %v757, 0.0
        %v807 = vsel %vm791, %v756, 0.0
        %v808 = vsel %vm792, %v755, 0.0
        %v809 = vsel %vm793, %v754, 0.0
        %v810 = vsel %vm794, %v753, 0.0
        %v811 = vsel %vm795, %v752, 0.0
        %v812 = vsel %vm796, %v751, 0.0
        %v813 = vsel %vm797, %v750, 0.0
        %v830 = vunpack.c.l.b16 %v508
        %v831 = vunpack.c.l.b16 %v509
        %v832 = vunpack.c.l.b16 %v510
        %v833 = vunpack.c.l.b16 %v511
        %v834 = vunpack.c.l.b16 %v512
        %v835 = vunpack.c.l.b16 %v513
        %v836 = vunpack.c.l.b16 %v514
        %v837 = vunpack.c.l.b16 %v515
        %v838 = vunpack.c.l.b16 %v516
        %v839 = vunpack.c.l.b16 %v517
        %v840 = vunpack.c.l.b16 %v518
        %v841 = vunpack.c.l.b16 %v519
        %v842 = vunpack.c.l.b16 %v520
        %v843 = vunpack.c.l.b16 %v521
        %v844 = vunpack.c.l.b16 %v522
        %v845 = vunpack.c.l.b16 %v523
        %v846 = vpack.c.b16 %v831, %v830
        %v847 = vpack.c.b16 %v833, %v832
        %v848 = vpack.c.b16 %v835, %v834
        %v849 = vpack.c.b16 %v837, %v836
        %v850 = vpack.c.b16 %v839, %v838
        %v851 = vpack.c.b16 %v841, %v840
        %v852 = vpack.c.b16 %v843, %v842
        %v853 = vpack.c.b16 %v845, %v844
        %862 = vmatprep.subr.bf16.mxu0 0
        %863 = vmatpush1.bf16.msra.mxu0 %v846
        %864 = vmatprep.subr.bf16.mxu0 0
        %865 = vmatpush1.bf16.msra.mxu0 %v847
        %866 = vmatprep.subr.bf16.mxu0 0
        %867 = vmatpush1.bf16.msra.mxu0 %v848
        %868 = vmatprep.subr.bf16.mxu0 0
        %869 = vmatpush1.bf16.msra.mxu0 %v849
        %870 = vmatprep.subr.bf16.mxu0 0
        %871 = vmatpush1.bf16.msra.mxu0 %v850
        %872 = vmatprep.subr.bf16.mxu0 0
        %873 = vmatpush1.bf16.msra.mxu0 %v851
        %874 = vmatprep.subr.bf16.mxu0 0
        %875 = vmatpush1.bf16.msra.mxu0 %v852
        %876 = vmatprep.subr.bf16.mxu0 0
        %877 = vmatpush1.bf16.msra.mxu0 %v853
        %878 = vmatprep.subr.bf16.mxu0 0
        %879 = vmatpush1.bf16.msra.mxu0 0
        %880 = vmatprep.subr.bf16.mxu0 0
        %881 = vmatpush1.bf16.msra.mxu0 0
        %882 = vmatprep.subr.bf16.mxu0 0
        %883 = vmatpush1.bf16.msra.mxu0 0
        %884 = vmatprep.subr.bf16.mxu0 0
        %885 = vmatpush1.bf16.msra.mxu0 0
        %886 = vmatprep.subr.bf16.mxu0 0
        %887 = vmatpush1.bf16.msra.mxu0 0
        %888 = vmatprep.subr.bf16.mxu0 0
        %889 = vmatpush1.bf16.msra.mxu0 0
        %890 = vmatprep.subr.bf16.mxu0 0
        %891 = vmatpush1.bf16.msra.mxu0 0
        %892 = vmatprep.subr.bf16.mxu0 0
        %893 = vmatpush1.bf16.msra.mxu0 0
        %894 = vmatprep.mubr.bf16.mxu0 0
        %895 = vmatmul.mubr.bf16.gmra.mrb[0].mxu0 %v572
        %v896 = vpop.f32.mrb[0].mxu0
        %v897 = vadd.f32 %v798, %v896
        %v898 = vpop.f32.mrb[0].mxu0
        %v899 = vpop.f32.mrb[0].mxu0
        %v900 = vadd.f32 %v799, %v899
        %v901 = vpop.f32.mrb[0].mxu0
        %902 = vmatprep.mubr.bf16.mxu0 0
        %903 = vmatmul.mubr.bf16.gmra.mrb[0].mxu0 %v573
        %v904 = vpop.f32.mrb[0].mxu0
        %v905 = vadd.f32 %v800, %v904
        %v906 = vpop.f32.mrb[0].mxu0
        %v907 = vpop.f32.mrb[0].mxu0
        %v908 = vadd.f32 %v801, %v907
        %v909 = vpop.f32.mrb[0].mxu0
        %910 = vmatprep.mubr.bf16.mxu0 0
        %911 = vmatmul.mubr.bf16.gmra.mrb[0].mxu0 %v574
        %v912 = vpop.f32.mrb[0].mxu0
        %v913 = vadd.f32 %v802, %v912
        %v914 = vpop.f32.mrb[0].mxu0
        %v915 = vpop.f32.mrb[0].mxu0
        %v916 = vadd.f32 %v803, %v915
        %v917 = vpop.f32.mrb[0].mxu0
        %918 = vmatprep.mubr.bf16.mxu0 0
        %919 = vmatmul.mubr.bf16.gmra.mrb[0].mxu0 %v575
        %v920 = vpop.f32.mrb[0].mxu0
        %v921 = vadd.f32 %v804, %v920
        %v922 = vpop.f32.mrb[0].mxu0
        %v923 = vpop.f32.mrb[0].mxu0
        %v924 = vadd.f32 %v805, %v923
        %v925 = vpop.f32.mrb[0].mxu0
        %926 = vmatprep.mubr.bf16.mxu0 0
        %927 = vmatmul.mubr.bf16.gmra.mrb[0].mxu0 %v576
        %v928 = vpop.f32.mrb[0].mxu0
        %v929 = vadd.f32 %v806, %v928
        %v930 = vpop.f32.mrb[0].mxu0
        %v931 = vpop.f32.mrb[0].mxu0
        %v932 = vadd.f32 %v807, %v931
        %v933 = vpop.f32.mrb[0].mxu0
        %934 = vmatprep.mubr.bf16.mxu0 0
        %935 = vmatmul.mubr.bf16.gmra.mrb[0].mxu0 %v577
        %v936 = vpop.f32.mrb[0].mxu0
        %v937 = vadd.f32 %v808, %v936
        %v938 = vpop.f32.mrb[0].mxu0
        %v939 = vpop.f32.mrb[0].mxu0
        %v940 = vadd.f32 %v809, %v939
        %v941 = vpop.f32.mrb[0].mxu0
        %942 = vmatprep.mubr.bf16.mxu0 0
        %943 = vmatmul.mubr.bf16.gmra.mrb[0].mxu0 %v578
        %v944 = vpop.f32.mrb[0].mxu0
        %v945 = vadd.f32 %v810, %v944
        %v946 = vpop.f32.mrb[0].mxu0
        %v947 = vpop.f32.mrb[0].mxu0
        %v948 = vadd.f32 %v811, %v947
        %v949 = vpop.f32.mrb[0].mxu0
        %950 = vmatprep.mubr.bf16.mxu0 0
        %951 = vmatmul.mubr.bf16.gmra.mrb[0].mxu0 %v579
        %v952 = vpop.f32.mrb[0].mxu0
        %v953 = vadd.f32 %v812, %v952
        %v954 = vpop.f32.mrb[0].mxu0
        %v955 = vpop.f32.mrb[0].mxu0
        %v956 = vadd.f32 %v813, %v955
        %v957 = vpop.f32.mrb[0].mxu0
        %958 = vdwg.mxu0
        %v959 = vld [vmem:[#allocation5 + $0x8] sm:$0xf]
        %v960 = vld [vmem:[#allocation5 + $0x14] sm:$0xf]
        %v961 = vld [vmem:[#allocation5 + $0x20] sm:$0xf]
        %v962 = vld [vmem:[#allocation5 + $0x2c] sm:$0xf]
        %v963 = vld [vmem:[#allocation5 + $0x38] sm:$0xf]
        %v964 = vld [vmem:[#allocation5 + $0x44] sm:$0xf]
        %v965 = vld [vmem:[#allocation5 + $0x50] sm:$0xf]
        %v966 = vld [vmem:[#allocation5 + $0x5c] sm:$0xf]
        %v967 = vld [vmem:[#allocation5 + $0x68] sm:$0xf]
        %v968 = vld [vmem:[#allocation5 + $0x74] sm:$0xf]
        %v969 = vld [vmem:[#allocation5 + $0x80] sm:$0xf]
        %v970 = vld [vmem:[#allocation5 + $0x8c] sm:$0xf]
        %v971 = vld [vmem:[#allocation5 + $0x98] sm:$0xf]
        %v972 = vld [vmem:[#allocation5 + $0xa4] sm:$0xf]
        %v973 = vld [vmem:[#allocation5 + $0xb0] sm:$0xf]
        %v974 = vld [vmem:[#allocation5 + $0xbc] sm:$0xf]
        %v991 = vunpack.c.l.b16 %v959
        %v992 = vunpack.c.l.b16 %v960
        %v993 = vunpack.c.l.b16 %v961
        %v994 = vunpack.c.l.b16 %v962
        %v995 = vunpack.c.l.b16 %v963
        %v996 = vunpack.c.l.b16 %v964
        %v997 = vunpack.c.l.b16 %v965
        %v998 = vunpack.c.l.b16 %v966
        %v999 = vunpack.c.l.b16 %v967
        %v1000 = vunpack.c.l.b16 %v968
        %v1001 = vunpack.c.l.b16 %v969
        %v1002 = vunpack.c.l.b16 %v970
        %v1003 = vunpack.c.l.b16 %v971
        %v1004 = vunpack.c.l.b16 %v972
        %v1005 = vunpack.c.l.b16 %v973
        %v1006 = vunpack.c.l.b16 %v974
        %v1007 = vpack.c.b16 %v992, %v991
        %v1008 = vpack.c.b16 %v994, %v993
        %v1009 = vpack.c.b16 %v996, %v995
        %v1010 = vpack.c.b16 %v998, %v997
        %v1011 = vpack.c.b16 %v1000, %v999
        %v1012 = vpack.c.b16 %v1002, %v1001
        %v1013 = vpack.c.b16 %v1004, %v1003
        %v1014 = vpack.c.b16 %v1006, %v1005
        %1023 = vmatprep.subr.bf16.mxu0 0
        %1024 = vmatpush1.bf16.msra.mxu0 %v1007
        %1025 = vmatprep.subr.bf16.mxu0 0
        %1026 = vmatpush1.bf16.msra.mxu0 %v1008
        %1027 = vmatprep.subr.bf16.mxu0 0
        %1028 = vmatpush1.bf16.msra.mxu0 %v1009
        %1029 = vmatprep.subr.bf16.mxu0 0
        %1030 = vmatpush1.bf16.msra.mxu0 %v1010
        %1031 = vmatprep.subr.bf16.mxu0 0
        %1032 = vmatpush1.bf16.msra.mxu0 %v1011
        %1033 = vmatprep.subr.bf16.mxu0 0
        %1034 = vmatpush1.bf16.msra.mxu0 %v1012
        %1035 = vmatprep.subr.bf16.mxu0 0
        %1036 = vmatpush1.bf16.msra.mxu0 %v1013
        %1037 = vmatprep.subr.bf16.mxu0 0
        %1038 = vmatpush1.bf16.msra.mxu0 %v1014
        %1039 = vmatprep.subr.bf16.mxu0 0
        %1040 = vmatpush1.bf16.msra.mxu0 0
        %1041 = vmatprep.subr.bf16.mxu0 0
        %1042 = vmatpush1.bf16.msra.mxu0 0
        %1043 = vmatprep.subr.bf16.mxu0 0
        %1044 = vmatpush1.bf16.msra.mxu0 0
        %1045 = vmatprep.subr.bf16.mxu0 0
        %1046 = vmatpush1.bf16.msra.mxu0 0
        %1047 = vmatprep.subr.bf16.mxu0 0
        %1048 = vmatpush1.bf16.msra.mxu0 0
        %1049 = vmatprep.subr.bf16.mxu0 0
        %1050 = vmatpush1.bf16.msra.mxu0 0
        %1051 = vmatprep.subr.bf16.mxu0 0
        %1052 = vmatpush1.bf16.msra.mxu0 0
        %1053 = vmatprep.subr.bf16.mxu0 0
        %1054 = vmatpush1.bf16.msra.mxu0 0
        %1055 = vmatprep.mubr.bf16.mxu0 0
        %1056 = vmatmul.mubr.bf16.gmra.mrb[0].mxu0 %v572
        %v1057 = vpop.f32.mrb[0].mxu0
        %v1058 = vadd.f32 0.0, %v1057
        %v1059 = vpop.f32.mrb[0].mxu0
        %v1060 = vpop.f32.mrb[0].mxu0
        %v1061 = vadd.f32 0.0, %v1060
        %v1062 = vpop.f32.mrb[0].mxu0
        %1063 = vmatprep.mubr.bf16.mxu0 0
        %1064 = vmatmul.mubr.bf16.gmra.mrb[0].mxu0 %v573
        %v1065 = vpop.f32.mrb[0].mxu0
        %v1066 = vadd.f32 0.0, %v1065
        %v1067 = vpop.f32.mrb[0].mxu0
        %v1068 = vpop.f32.mrb[0].mxu0
        %v1069 = vadd.f32 0.0, %v1068
        %v1070 = vpop.f32.mrb[0].mxu0
        %1071 = vmatprep.mubr.bf16.mxu0 0
        %1072 = vmatmul.mubr.bf16.gmra.mrb[0].mxu0 %v574
        %v1073 = vpop.f32.mrb[0].mxu0
        %v1074 = vadd.f32 0.0, %v1073
        %v1075 = vpop.f32.mrb[0].mxu0
        %v1076 = vpop.f32.mrb[0].mxu0
        %v1077 = vadd.f32 0.0, %v1076
        %v1078 = vpop.f32.mrb[0].mxu0
        %1079 = vmatprep.mubr.bf16.mxu0 0
        %1080 = vmatmul.mubr.bf16.gmra.mrb[0].mxu0 %v575
        %v1081 = vpop.f32.mrb[0].mxu0
        %v1082 = vadd.f32 0.0, %v1081
        %v1083 = vpop.f32.mrb[0].mxu0
        %v1084 = vpop.f32.mrb[0].mxu0
        %v1085 = vadd.f32 0.0, %v1084
        %v1086 = vpop.f32.mrb[0].mxu0
        %1087 = vmatprep.mubr.bf16.mxu0 0
        %1088 = vmatmul.mubr.bf16.gmra.mrb[0].mxu0 %v576
        %v1089 = vpop.f32.mrb[0].mxu0
        %v1090 = vadd.f32 0.0, %v1089
        %v1091 = vpop.f32.mrb[0].mxu0
        %v1092 = vpop.f32.mrb[0].mxu0
        %v1093 = vadd.f32 0.0, %v1092
        %v1094 = vpop.f32.mrb[0].mxu0
        %1095 = vmatprep.mubr.bf16.mxu0 0
        %1096 = vmatmul.mubr.bf16.gmra.mrb[0].mxu0 %v577
        %v1097 = vpop.f32.mrb[0].mxu0
        %v1098 = vadd.f32 0.0, %v1097
        %v1099 = vpop.f32.mrb[0].mxu0
        %v1100 = vpop.f32.mrb[0].mxu0
        %v1101 = vadd.f32 0.0, %v1100
        %v1102 = vpop.f32.mrb[0].mxu0
        %1103 = vmatprep.mubr.bf16.mxu0 0
        %1104 = vmatmul.mubr.bf16.gmra.mrb[0].mxu0 %v578
        %v1105 = vpop.f32.mrb[0].mxu0
        %v1106 = vadd.f32 0.0, %v1105
        %v1107 = vpop.f32.mrb[0].mxu0
        %v1108 = vpop.f32.mrb[0].mxu0
        %v1109 = vadd.f32 0.0, %v1108
        %v1110 = vpop.f32.mrb[0].mxu0
        %1111 = vmatprep.mubr.bf16.mxu0 0
        %1112 = vmatmul.mubr.bf16.gmra.mrb[0].mxu0 %v579
        %v1113 = vpop.f32.mrb[0].mxu0
        %v1114 = vadd.f32 0.0, %v1113
        %v1115 = vpop.f32.mrb[0].mxu0
        %v1116 = vpop.f32.mrb[0].mxu0
        %v1117 = vadd.f32 0.0, %v1116
        %v1118 = vpop.f32.mrb[0].mxu0
        %1119 = vdwg.mxu0
        %v1120 = vrot.slane %v1058, 1
        %v1121 = vrot.slane %v1061, 1
        %v1122 = vrot.slane %v1066, 1
        %v1123 = vrot.slane %v1069, 1
        %v1124 = vrot.slane %v1074, 1
        %v1125 = vrot.slane %v1077, 1
        %v1126 = vrot.slane %v1082, 1
        %v1127 = vrot.slane %v1085, 1
        %v1128 = vrot.slane %v1090, 1
        %v1129 = vrot.slane %v1093, 1
        %v1130 = vrot.slane %v1098, 1
        %v1131 = vrot.slane %v1101, 1
        %v1132 = vrot.slane %v1106, 1
        %v1133 = vrot.slane %v1109, 1
        %v1134 = vrot.slane %v1114, 1
        %v1135 = vrot.slane %v1117, 1
        %vm1136 = vcmp.lt.s32.totalorder %v266, 7
        %v1137 = vsel %vm1136, %v1134, %v1135
        %v1138 = vsel %vm1136, %v1133, %v1134
        %v1139 = vsel %vm1136, %v1132, %v1133
        %v1140 = vsel %vm1136, %v1131, %v1132
        %v1141 = vsel %vm1136, %v1130, %v1131
        %v1142 = vsel %vm1136, %v1129, %v1130
        %v1143 = vsel %vm1136, %v1128, %v1129
        %v1144 = vsel %vm1136, %v1127, %v1128
        %v1145 = vsel %vm1136, %v1126, %v1127
        %v1146 = vsel %vm1136, %v1125, %v1126
        %v1147 = vsel %vm1136, %v1124, %v1125
        %v1148 = vsel %vm1136, %v1123, %v1124
        %v1149 = vsel %vm1136, %v1122, %v1123
        %v1150 = vsel %vm1136, %v1121, %v1122
        %v1151 = vsel %vm1136, %v1120, %v1121
        %v1152 = vsel %vm1136, %v1135, %v1120
        %v1153 = vsel %vm490, 1, 0
        %v1154 = vsel %vm491, 1, 0
        %v1155 = vsel %vm492, 1, 0
        %v1156 = vsel %vm493, 1, 0
        %v1157 = vsel %vm494, 1, 0
        %v1158 = vsel %vm495, 1, 0
        %v1159 = vsel %vm496, 1, 0
        %v1160 = vsel %vm497, 1, 0
        %v1161 = vsel %vm498, 1, 0
        %v1162 = vsel %vm499, 1, 0
        %v1163 = vsel %vm500, 1, 0
        %v1164 = vsel %vm501, 1, 0
        %v1165 = vsel %vm502, 1, 0
        %v1166 = vsel %vm503, 1, 0
        %v1167 = vsel %vm504, 1, 0
        %v1168 = vsel %vm505, 1, 0
        %vm1169 = vcmp.eq.s32.totalorder %v1153, 1
        %vm1170 = vcmp.eq.s32.totalorder %v1154, 1
        %vm1171 = vcmp.eq.s32.totalorder %v1155, 1
        %vm1172 = vcmp.eq.s32.totalorder %v1156, 1
        %vm1173 = vcmp.eq.s32.totalorder %v1157, 1
        %vm1174 = vcmp.eq.s32.totalorder %v1158, 1
        %vm1175 = vcmp.eq.s32.totalorder %v1159, 1
        %vm1176 = vcmp.eq.s32.totalorder %v1160, 1
        %vm1177 = vcmp.eq.s32.totalorder %v1161, 1
        %vm1178 = vcmp.eq.s32.totalorder %v1162, 1
        %vm1179 = vcmp.eq.s32.totalorder %v1163, 1
        %vm1180 = vcmp.eq.s32.totalorder %v1164, 1
        %vm1181 = vcmp.eq.s32.totalorder %v1165, 1
        %vm1182 = vcmp.eq.s32.totalorder %v1166, 1
        %vm1183 = vcmp.eq.s32.totalorder %v1167, 1
        %vm1184 = vcmp.eq.s32.totalorder %v1168, 1
        %v1185 = vsel %vm1169, %v1151, 0.0
        %v1186 = vsel %vm1170, %v1150, 0.0
        %v1187 = vsel %vm1171, %v1149, 0.0
        %v1188 = vsel %vm1172, %v1148, 0.0
        %v1189 = vsel %vm1173, %v1147, 0.0
        %v1190 = vsel %vm1174, %v1146, 0.0
        %v1191 = vsel %vm1175, %v1145, 0.0
        %v1192 = vsel %vm1176, %v1144, 0.0
        %v1193 = vsel %vm1177, %v1143, 0.0
        %v1194 = vsel %vm1178, %v1142, 0.0
        %v1195 = vsel %vm1179, %v1141, 0.0
        %v1196 = vsel %vm1180, %v1140, 0.0
        %v1197 = vsel %vm1181, %v1139, 0.0
        %v1198 = vsel %vm1182, %v1138, 0.0
        %v1199 = vsel %vm1183, %v1137, 0.0
        %v1200 = vsel %vm1184, %v1152, 0.0
        %v1201 = vadd.f32 %v897, %v1185
        %v1202 = vadd.f32 %v900, %v1186
        %v1203 = vadd.f32 %v905, %v1187
        %v1204 = vadd.f32 %v908, %v1188
        %v1205 = vadd.f32 %v913, %v1189
        %v1206 = vadd.f32 %v916, %v1190
        %v1207 = vadd.f32 %v921, %v1191
        %v1208 = vadd.f32 %v924, %v1192
        %v1209 = vadd.f32 %v929, %v1193
        %v1210 = vadd.f32 %v932, %v1194
        %v1211 = vadd.f32 %v937, %v1195
        %v1212 = vadd.f32 %v940, %v1196
        %v1213 = vadd.f32 %v945, %v1197
        %v1214 = vadd.f32 %v948, %v1198
        %v1215 = vadd.f32 %v953, %v1199
        %v1216 = vadd.f32 %v956, %v1200
        %v1217 = vlaneseq
        %v1218 = vshrl.u32 %v1217, 7
        %v1219 = vsub.s32 0, %v1218
        %v1220 = vrot.slane %v506, %v1219
        %v1221 = vadd.f32 %v1201, %v1220
        %v1222 = vadd.f32 %v1202, %v1220
        %v1223 = vadd.f32 %v1203, %v1220
        %v1224 = vadd.f32 %v1204, %v1220
        %v1225 = vadd.f32 %v1205, %v1220
        %v1226 = vadd.f32 %v1206, %v1220
        %v1227 = vadd.f32 %v1207, %v1220
        %v1228 = vadd.f32 %v1208, %v1220
        %v1229 = vadd.f32 %v1209, %v1220
        %v1230 = vadd.f32 %v1210, %v1220
        %v1231 = vadd.f32 %v1211, %v1220
        %v1232 = vadd.f32 %v1212, %v1220
        %v1233 = vadd.f32 %v1213, %v1220
        %v1234 = vadd.f32 %v1214, %v1220
        %v1235 = vadd.f32 %v1215, %v1220
        %v1236 = vadd.f32 %v1216, %v1220
        %v1237 = vmax.f32 %v1221, 0.0
        %v1238 = vmax.f32 %v1222, 0.0
        %v1239 = vmax.f32 %v1223, 0.0
        %v1240 = vmax.f32 %v1224, 0.0
        %v1241 = vmax.f32 %v1225, 0.0
        %v1242 = vmax.f32 %v1226, 0.0
        %v1243 = vmax.f32 %v1227, 0.0
        %v1244 = vmax.f32 %v1228, 0.0
        %v1245 = vmax.f32 %v1229, 0.0
        %v1246 = vmax.f32 %v1230, 0.0
        %v1247 = vmax.f32 %v1231, 0.0
        %v1248 = vmax.f32 %v1232, 0.0
        %v1249 = vmax.f32 %v1233, 0.0
        %v1250 = vmax.f32 %v1234, 0.0
        %v1251 = vmax.f32 %v1235, 0.0
        %v1252 = vmax.f32 %v1236, 0.0
        %v1253 = vpack.c.bf16 %v1238, %v1237
        %v1254 = vpack.c.bf16 %v1240, %v1239
        %v1255 = vpack.c.bf16 %v1242, %v1241
        %v1256 = vpack.c.bf16 %v1244, %v1243
        %v1257 = vpack.c.bf16 %v1246, %v1245
        %v1258 = vpack.c.bf16 %v1248, %v1247
        %v1259 = vpack.c.bf16 %v1250, %v1249
        %v1260 = vpack.c.bf16 %v1252, %v1251
        %v1261 = vld [vmem:[#allocation7 + $0x4] sm:$0xf]
        %v1262 = vld [vmem:[#allocation7 + $0x10] sm:$0xf]
        %v1263 = vld [vmem:[#allocation7 + $0x1c] sm:$0xf]
        %v1264 = vld [vmem:[#allocation7 + $0x28] sm:$0xf]
        %v1265 = vld [vmem:[#allocation7 + $0x34] sm:$0xf]
        %v1266 = vld [vmem:[#allocation7 + $0x40] sm:$0xf]
        %v1267 = vld [vmem:[#allocation7 + $0x4c] sm:$0xf]
        %v1268 = vld [vmem:[#allocation7 + $0x58] sm:$0xf]
        %v1269 = vld [vmem:[#allocation7 + $0x64] sm:$0xf]
        %v1270 = vld [vmem:[#allocation7 + $0x70] sm:$0xf]
        %v1271 = vld [vmem:[#allocation7 + $0x7c] sm:$0xf]
        %v1272 = vld [vmem:[#allocation7 + $0x88] sm:$0xf]
        %v1273 = vld [vmem:[#allocation7 + $0x94] sm:$0xf]
        %v1274 = vld [vmem:[#allocation7 + $0xa0] sm:$0xf]
        %v1275 = vld [vmem:[#allocation7 + $0xac] sm:$0xf]
        %v1276 = vld [vmem:[#allocation7 + $0xb8] sm:$0xf]
        %v1277 = vld [vmem:[#allocation7] sm:$0xf]
        %v1278 = vld [vmem:[#allocation7 + $0xc] sm:$0xf]
        %v1279 = vld [vmem:[#allocation7 + $0x18] sm:$0xf]
        %v1280 = vld [vmem:[#allocation7 + $0x24] sm:$0xf]
        %v1281 = vld [vmem:[#allocation7 + $0x30] sm:$0xf]
        %v1282 = vld [vmem:[#allocation7 + $0x3c] sm:$0xf]
        %v1283 = vld [vmem:[#allocation7 + $0x48] sm:$0xf]
        %v1284 = vld [vmem:[#allocation7 + $0x54] sm:$0xf]
        %v1285 = vld [vmem:[#allocation7 + $0x60] sm:$0xf]
        %v1286 = vld [vmem:[#allocation7 + $0x6c] sm:$0xf]
        %v1287 = vld [vmem:[#allocation7 + $0x78] sm:$0xf]
        %v1288 = vld [vmem:[#allocation7 + $0x84] sm:$0xf]
        %v1289 = vld [vmem:[#allocation7 + $0x90] sm:$0xf]
        %v1290 = vld [vmem:[#allocation7 + $0x9c] sm:$0xf]
        %v1291 = vld [vmem:[#allocation7 + $0xa8] sm:$0xf]
        %v1292 = vld [vmem:[#allocation7 + $0xb4] sm:$0xf]
        %v1309 = vunpack.c.l.b16 %v1277
        %v1310 = vunpack.c.l.b16 %v1278
        %v1311 = vunpack.c.l.b16 %v1279
        %v1312 = vunpack.c.l.b16 %v1280
        %v1313 = vunpack.c.l.b16 %v1281
        %v1314 = vunpack.c.l.b16 %v1282
        %v1315 = vunpack.c.l.b16 %v1283
        %v1316 = vunpack.c.l.b16 %v1284
        %v1317 = vunpack.c.l.b16 %v1285
        %v1318 = vunpack.c.l.b16 %v1286
        %v1319 = vunpack.c.l.b16 %v1287
        %v1320 = vunpack.c.l.b16 %v1288
        %v1321 = vunpack.c.l.b16 %v1289
        %v1322 = vunpack.c.l.b16 %v1290
        %v1323 = vunpack.c.l.b16 %v1291
        %v1324 = vunpack.c.l.b16 %v1292
        %v1325 = vpack.c.b16 %v1310, %v1309
        %v1326 = vpack.c.b16 %v1312, %v1311
        %v1327 = vpack.c.b16 %v1314, %v1313
        %v1328 = vpack.c.b16 %v1316, %v1315
        %v1329 = vpack.c.b16 %v1318, %v1317
        %v1330 = vpack.c.b16 %v1320, %v1319
        %v1331 = vpack.c.b16 %v1322, %v1321
        %v1332 = vpack.c.b16 %v1324, %v1323
        %1341 = vmatprep.subr.bf16.mxu0 0
        %1342 = vmatpush1.bf16.msra.mxu0 %v1325
        %1343 = vmatprep.subr.bf16.mxu0 0
        %1344 = vmatpush1.bf16.msra.mxu0 %v1326
        %1345 = vmatprep.subr.bf16.mxu0 0
        %1346 = vmatpush1.bf16.msra.mxu0 %v1327
        %1347 = vmatprep.subr.bf16.mxu0 0
        %1348 = vmatpush1.bf16.msra.mxu0 %v1328
        %1349 = vmatprep.subr.bf16.mxu0 0
        %1350 = vmatpush1.bf16.msra.mxu0 %v1329
        %1351 = vmatprep.subr.bf16.mxu0 0
        %1352 = vmatpush1.bf16.msra.mxu0 %v1330
        %1353 = vmatprep.subr.bf16.mxu0 0
        %1354 = vmatpush1.bf16.msra.mxu0 %v1331
        %1355 = vmatprep.subr.bf16.mxu0 0
        %1356 = vmatpush1.bf16.msra.mxu0 %v1332
        %1357 = vmatprep.subr.bf16.mxu0 0
        %1358 = vmatpush1.bf16.msra.mxu0 0
        %1359 = vmatprep.subr.bf16.mxu0 0
        %1360 = vmatpush1.bf16.msra.mxu0 0
        %1361 = vmatprep.subr.bf16.mxu0 0
        %1362 = vmatpush1.bf16.msra.mxu0 0
        %1363 = vmatprep.subr.bf16.mxu0 0
        %1364 = vmatpush1.bf16.msra.mxu0 0
        %1365 = vmatprep.subr.bf16.mxu0 0
        %1366 = vmatpush1.bf16.msra.mxu0 0
        %1367 = vmatprep.subr.bf16.mxu0 0
        %1368 = vmatpush1.bf16.msra.mxu0 0
        %1369 = vmatprep.subr.bf16.mxu0 0
        %1370 = vmatpush1.bf16.msra.mxu0 0
        %1371 = vmatprep.subr.bf16.mxu0 0
        %1372 = vmatpush1.bf16.msra.mxu0 0
        %1373 = vmatprep.mubr.bf16.mxu0 0
        %1374 = vmatmul.mubr.bf16.gmra.mrb[0].mxu0 %v1253
        %v1375 = vpop.f32.mrb[0].mxu0
        %v1376 = vadd.f32 0.0, %v1375
        %v1377 = vpop.f32.mrb[0].mxu0
        %v1378 = vpop.f32.mrb[0].mxu0
        %v1379 = vadd.f32 0.0, %v1378
        %v1380 = vpop.f32.mrb[0].mxu0
        %1381 = vmatprep.mubr.bf16.mxu0 0
        %1382 = vmatmul.mubr.bf16.gmra.mrb[0].mxu0 %v1254
        %v1383 = vpop.f32.mrb[0].mxu0
        %v1384 = vadd.f32 0.0, %v1383
        %v1385 = vpop.f32.mrb[0].mxu0
        %v1386 = vpop.f32.mrb[0].mxu0
        %v1387 = vadd.f32 0.0, %v1386
        %v1388 = vpop.f32.mrb[0].mxu0
        %1389 = vmatprep.mubr.bf16.mxu0 0
        %1390 = vmatmul.mubr.bf16.gmra.mrb[0].mxu0 %v1255
        %v1391 = vpop.f32.mrb[0].mxu0
        %v1392 = vadd.f32 0.0, %v1391
        %v1393 = vpop.f32.mrb[0].mxu0
        %v1394 = vpop.f32.mrb[0].mxu0
        %v1395 = vadd.f32 0.0, %v1394
        %v1396 = vpop.f32.mrb[0].mxu0
        %1397 = vmatprep.mubr.bf16.mxu0 0
        %1398 = vmatmul.mubr.bf16.gmra.mrb[0].mxu0 %v1256
        %v1399 = vpop.f32.mrb[0].mxu0
        %v1400 = vadd.f32 0.0, %v1399
        %v1401 = vpop.f32.mrb[0].mxu0
        %v1402 = vpop.f32.mrb[0].mxu0
        %v1403 = vadd.f32 0.0, %v1402
        %v1404 = vpop.f32.mrb[0].mxu0
        %1405 = vmatprep.mubr.bf16.mxu0 0
        %1406 = vmatmul.mubr.bf16.gmra.mrb[0].mxu0 %v1257
        %v1407 = vpop.f32.mrb[0].mxu0
        %v1408 = vadd.f32 0.0, %v1407
        %v1409 = vpop.f32.mrb[0].mxu0
        %v1410 = vpop.f32.mrb[0].mxu0
        %v1411 = vadd.f32 0.0, %v1410
        %v1412 = vpop.f32.mrb[0].mxu0
        %1413 = vmatprep.mubr.bf16.mxu0 0
        %1414 = vmatmul.mubr.bf16.gmra.mrb[0].mxu0 %v1258
        %v1415 = vpop.f32.mrb[0].mxu0
        %v1416 = vadd.f32 0.0, %v1415
        %v1417 = vpop.f32.mrb[0].mxu0
        %v1418 = vpop.f32.mrb[0].mxu0
        %v1419 = vadd.f32 0.0, %v1418
        %v1420 = vpop.f32.mrb[0].mxu0
        %1421 = vmatprep.mubr.bf16.mxu0 0
        %1422 = vmatmul.mubr.bf16.gmra.mrb[0].mxu0 %v1259
        %v1423 = vpop.f32.mrb[0].mxu0
        %v1424 = vadd.f32 0.0, %v1423
        %v1425 = vpop.f32.mrb[0].mxu0
        %v1426 = vpop.f32.mrb[0].mxu0
        %v1427 = vadd.f32 0.0, %v1426
        %v1428 = vpop.f32.mrb[0].mxu0
        %1429 = vmatprep.mubr.bf16.mxu0 0
        %1430 = vmatmul.mubr.bf16.gmra.mrb[0].mxu0 %v1260
        %v1431 = vpop.f32.mrb[0].mxu0
        %v1432 = vadd.f32 0.0, %v1431
        %v1433 = vpop.f32.mrb[0].mxu0
        %v1434 = vpop.f32.mrb[0].mxu0
        %v1435 = vadd.f32 0.0, %v1434
        %v1436 = vpop.f32.mrb[0].mxu0
        %1437 = vdwg.mxu0
        %v1438 = vrot.slane %v1376, 7
        %v1439 = vrot.slane %v1379, 7
        %v1440 = vrot.slane %v1384, 7
        %v1441 = vrot.slane %v1387, 7
        %v1442 = vrot.slane %v1392, 7
        %v1443 = vrot.slane %v1395, 7
        %v1444 = vrot.slane %v1400, 7
        %v1445 = vrot.slane %v1403, 7
        %v1446 = vrot.slane %v1408, 7
        %v1447 = vrot.slane %v1411, 7
        %v1448 = vrot.slane %v1416, 7
        %v1449 = vrot.slane %v1419, 7
        %v1450 = vrot.slane %v1424, 7
        %v1451 = vrot.slane %v1427, 7
        %v1452 = vrot.slane %v1432, 7
        %v1453 = vrot.slane %v1435, 7
        %v1454 = vsel %vm749, %v1452, %v1453
        %v1455 = vsel %vm749, %v1451, %v1452
        %v1456 = vsel %vm749, %v1450, %v1451
        %v1457 = vsel %vm749, %v1449, %v1450
        %v1458 = vsel %vm749, %v1448, %v1449
        %v1459 = vsel %vm749, %v1447, %v1448
        %v1460 = vsel %vm749, %v1446, %v1447
        %v1461 = vsel %vm749, %v1445, %v1446
        %v1462 = vsel %vm749, %v1444, %v1445
        %v1463 = vsel %vm749, %v1443, %v1444
        %v1464 = vsel %vm749, %v1442, %v1443
        %v1465 = vsel %vm749, %v1441, %v1442
        %v1466 = vsel %vm749, %v1440, %v1441
        %v1467 = vsel %vm749, %v1439, %v1440
        %v1468 = vsel %vm749, %v1438, %v1439
        %v1469 = vsel %vm749, %v1453, %v1438
        %v1470 = vsel %vm782, %v1469, 0.0
        %v1471 = vsel %vm783, %v1468, 0.0
        %v1472 = vsel %vm784, %v1467, 0.0
        %v1473 = vsel %vm785, %v1466, 0.0
        %v1474 = vsel %vm786, %v1465, 0.0
        %v1475 = vsel %vm787, %v1464, 0.0
        %v1476 = vsel %vm788, %v1463, 0.0
        %v1477 = vsel %vm789, %v1462, 0.0
        %v1478 = vsel %vm790, %v1461, 0.0
        %v1479 = vsel %vm791, %v1460, 0.0
        %v1480 = vsel %vm792, %v1459, 0.0
        %v1481 = vsel %vm793, %v1458, 0.0
        %v1482 = vsel %vm794, %v1457, 0.0
        %v1483 = vsel %vm795, %v1456, 0.0
        %v1484 = vsel %vm796, %v1455, 0.0
        %v1485 = vsel %vm797, %v1454, 0.0
        %v1502 = vunpack.c.l.b16 %v1261
        %v1503 = vunpack.c.l.b16 %v1262
        %v1504 = vunpack.c.l.b16 %v1263
        %v1505 = vunpack.c.l.b16 %v1264
        %v1506 = vunpack.c.l.b16 %v1265
        %v1507 = vunpack.c.l.b16 %v1266
        %v1508 = vunpack.c.l.b16 %v1267
        %v1509 = vunpack.c.l.b16 %v1268
        %v1510 = vunpack.c.l.b16 %v1269
        %v1511 = vunpack.c.l.b16 %v1270
        %v1512 = vunpack.c.l.b16 %v1271
        %v1513 = vunpack.c.l.b16 %v1272
        %v1514 = vunpack.c.l.b16 %v1273
        %v1515 = vunpack.c.l.b16 %v1274
        %v1516 = vunpack.c.l.b16 %v1275
        %v1517 = vunpack.c.l.b16 %v1276
        %v1518 = vpack.c.b16 %v1503, %v1502
        %v1519 = vpack.c.b16 %v1505, %v1504
        %v1520 = vpack.c.b16 %v1507, %v1506
        %v1521 = vpack.c.b16 %v1509, %v1508
        %v1522 = vpack.c.b16 %v1511, %v1510
        %v1523 = vpack.c.b16 %v1513, %v1512
        %v1524 = vpack.c.b16 %v1515, %v1514
        %v1525 = vpack.c.b16 %v1517, %v1516
        %1534 = vmatprep.subr.bf16.mxu0 0
        %1535 = vmatpush1.bf16.msra.mxu0 %v1518
        %1536 = vmatprep.subr.bf16.mxu0 0
        %1537 = vmatpush1.bf16.msra.mxu0 %v1519
        %1538 = vmatprep.subr.bf16.mxu0 0
        %1539 = vmatpush1.bf16.msra.mxu0 %v1520
        %1540 = vmatprep.subr.bf16.mxu0 0
        %1541 = vmatpush1.bf16.msra.mxu0 %v1521
        %1542 = vmatprep.subr.bf16.mxu0 0
        %1543 = vmatpush1.bf16.msra.mxu0 %v1522
        %1544 = vmatprep.subr.bf16.mxu0 0
        %1545 = vmatpush1.bf16.msra.mxu0 %v1523
        %1546 = vmatprep.subr.bf16.mxu0 0
        %1547 = vmatpush1.bf16.msra.mxu0 %v1524
        %1548 = vmatprep.subr.bf16.mxu0 0
        %1549 = vmatpush1.bf16.msra.mxu0 %v1525
        %1550 = vmatprep.subr.bf16.mxu0 0
        %1551 = vmatpush1.bf16.msra.mxu0 0
        %1552 = vmatprep.subr.bf16.mxu0 0
        %1553 = vmatpush1.bf16.msra.mxu0 0
        %1554 = vmatprep.subr.bf16.mxu0 0
        %1555 = vmatpush1.bf16.msra.mxu0 0
        %1556 = vmatprep.subr.bf16.mxu0 0
        %1557 = vmatpush1.bf16.msra.mxu0 0
        %1558 = vmatprep.subr.bf16.mxu0 0
        %1559 = vmatpush1.bf16.msra.mxu0 0
        %1560 = vmatprep.subr.bf16.mxu0 0
        %1561 = vmatpush1.bf16.msra.mxu0 0
        %1562 = vmatprep.subr.bf16.mxu0 0
        %1563 = vmatpush1.bf16.msra.mxu0 0
        %1564 = vmatprep.subr.bf16.mxu0 0
        %1565 = vmatpush1.bf16.msra.mxu0 0
        %1566 = vmatprep.mubr.bf16.mxu0 0
        %1567 = vmatmul.mubr.bf16.gmra.mrb[0].mxu0 %v1253
        %v1568 = vpop.f32.mrb[0].mxu0
        %v1569 = vadd.f32 %v1470, %v1568
        %v1570 = vpop.f32.mrb[0].mxu0
        %v1571 = vpop.f32.mrb[0].mxu0
        %v1572 = vadd.f32 %v1471, %v1571
        %v1573 = vpop.f32.mrb[0].mxu0
        %1574 = vmatprep.mubr.bf16.mxu0 0
        %1575 = vmatmul.mubr.bf16.gmra.mrb[0].mxu0 %v1254
        %v1576 = vpop.f32.mrb[0].mxu0
        %v1577 = vadd.f32 %v1472, %v1576
        %v1578 = vpop.f32.mrb[0].mxu0
        %v1579 = vpop.f32.mrb[0].mxu0
        %v1580 = vadd.f32 %v1473, %v1579
        %v1581 = vpop.f32.mrb[0].mxu0
        %1582 = vmatprep.mubr.bf16.mxu0 0
        %1583 = vmatmul.mubr.bf16.gmra.mrb[0].mxu0 %v1255
        %v1584 = vpop.f32.mrb[0].mxu0
        %v1585 = vadd.f32 %v1474, %v1584
        %v1586 = vpop.f32.mrb[0].mxu0
        %v1587 = vpop.f32.mrb[0].mxu0
        %v1588 = vadd.f32 %v1475, %v1587
        %v1589 = vpop.f32.mrb[0].mxu0
        %1590 = vmatprep.mubr.bf16.mxu0 0
        %1591 = vmatmul.mubr.bf16.gmra.mrb[0].mxu0 %v1256
        %v1592 = vpop.f32.mrb[0].mxu0
        %v1593 = vadd.f32 %v1476, %v1592
        %v1594 = vpop.f32.mrb[0].mxu0
        %v1595 = vpop.f32.mrb[0].mxu0
        %v1596 = vadd.f32 %v1477, %v1595
        %v1597 = vpop.f32.mrb[0].mxu0
        %1598 = vmatprep.mubr.bf16.mxu0 0
        %1599 = vmatmul.mubr.bf16.gmra.mrb[0].mxu0 %v1257
        %v1600 = vpop.f32.mrb[0].mxu0
        %v1601 = vadd.f32 %v1478, %v1600
        %v1602 = vpop.f32.mrb[0].mxu0
        %v1603 = vpop.f32.mrb[0].mxu0
        %v1604 = vadd.f32 %v1479, %v1603
        %v1605 = vpop.f32.mrb[0].mxu0
        %1606 = vmatprep.mubr.bf16.mxu0 0
        %1607 = vmatmul.mubr.bf16.gmra.mrb[0].mxu0 %v1258
        %v1608 = vpop.f32.mrb[0].mxu0
        %v1609 = vadd.f32 %v1480, %v1608
        %v1610 = vpop.f32.mrb[0].mxu0
        %v1611 = vpop.f32.mrb[0].mxu0
        %v1612 = vadd.f32 %v1481, %v1611
        %v1613 = vpop.f32.mrb[0].mxu0
        %1614 = vmatprep.mubr.bf16.mxu0 0
        %1615 = vmatmul.mubr.bf16.gmra.mrb[0].mxu0 %v1259
        %v1616 = vpop.f32.mrb[0].mxu0
        %v1617 = vadd.f32 %v1482, %v1616
        %v1618 = vpop.f32.mrb[0].mxu0
        %v1619 = vpop.f32.mrb[0].mxu0
        %v1620 = vadd.f32 %v1483, %v1619
        %v1621 = vpop.f32.mrb[0].mxu0
        %1622 = vmatprep.mubr.bf16.mxu0 0
        %1623 = vmatmul.mubr.bf16.gmra.mrb[0].mxu0 %v1260
        %v1624 = vpop.f32.mrb[0].mxu0
        %v1625 = vadd.f32 %v1484, %v1624
        %v1626 = vpop.f32.mrb[0].mxu0
        %v1627 = vpop.f32.mrb[0].mxu0
        %v1628 = vadd.f32 %v1485, %v1627
        %v1629 = vpop.f32.mrb[0].mxu0
        %1630 = vdwg.mxu0
        %v1631 = vld [vmem:[#allocation7 + $0x8] sm:$0xf]
        %v1632 = vld [vmem:[#allocation7 + $0x14] sm:$0xf]
        %v1633 = vld [vmem:[#allocation7 + $0x20] sm:$0xf]
        %v1634 = vld [vmem:[#allocation7 + $0x2c] sm:$0xf]
        %v1635 = vld [vmem:[#allocation7 + $0x38] sm:$0xf]
        %v1636 = vld [vmem:[#allocation7 + $0x44] sm:$0xf]
        %v1637 = vld [vmem:[#allocation7 + $0x50] sm:$0xf]
        %v1638 = vld [vmem:[#allocation7 + $0x5c] sm:$0xf]
        %v1639 = vld [vmem:[#allocation7 + $0x68] sm:$0xf]
        %v1640 = vld [vmem:[#allocation7 + $0x74] sm:$0xf]
        %v1641 = vld [vmem:[#allocation7 + $0x80] sm:$0xf]
        %v1642 = vld [vmem:[#allocation7 + $0x8c] sm:$0xf]
        %v1643 = vld [vmem:[#allocation7 + $0x98] sm:$0xf]
        %v1644 = vld [vmem:[#allocation7 + $0xa4] sm:$0xf]
        %v1645 = vld [vmem:[#allocation7 + $0xb0] sm:$0xf]
        %v1646 = vld [vmem:[#allocation7 + $0xbc] sm:$0xf]
        %v1663 = vunpack.c.l.b16 %v1631
        %v1664 = vunpack.c.l.b16 %v1632
        %v1665 = vunpack.c.l.b16 %v1633
        %v1666 = vunpack.c.l.b16 %v1634
        %v1667 = vunpack.c.l.b16 %v1635
        %v1668 = vunpack.c.l.b16 %v1636
        %v1669 = vunpack.c.l.b16 %v1637
        %v1670 = vunpack.c.l.b16 %v1638
        %v1671 = vunpack.c.l.b16 %v1639
        %v1672 = vunpack.c.l.b16 %v1640
        %v1673 = vunpack.c.l.b16 %v1641
        %v1674 = vunpack.c.l.b16 %v1642
        %v1675 = vunpack.c.l.b16 %v1643
        %v1676 = vunpack.c.l.b16 %v1644
        %v1677 = vunpack.c.l.b16 %v1645
        %v1678 = vunpack.c.l.b16 %v1646
        %v1679 = vpack.c.b16 %v1664, %v1663
        %v1680 = vpack.c.b16 %v1666, %v1665
        %v1681 = vpack.c.b16 %v1668, %v1667
        %v1682 = vpack.c.b16 %v1670, %v1669
        %v1683 = vpack.c.b16 %v1672, %v1671
        %v1684 = vpack.c.b16 %v1674, %v1673
        %v1685 = vpack.c.b16 %v1676, %v1675
        %v1686 = vpack.c.b16 %v1678, %v1677
        %1695 = vmatprep.subr.bf16.mxu0 0
        %1696 = vmatpush1.bf16.msra.mxu0 %v1679
        %1697 = vmatprep.subr.bf16.mxu0 0
        %1698 = vmatpush1.bf16.msra.mxu0 %v1680
        %1699 = vmatprep.subr.bf16.mxu0 0
        %1700 = vmatpush1.bf16.msra.mxu0 %v1681
        %1701 = vmatprep.subr.bf16.mxu0 0
        %1702 = vmatpush1.bf16.msra.mxu0 %v1682
        %1703 = vmatprep.subr.bf16.mxu0 0
        %1704 = vmatpush1.bf16.msra.mxu0 %v1683
        %1705 = vmatprep.subr.bf16.mxu0 0
        %1706 = vmatpush1.bf16.msra.mxu0 %v1684
        %1707 = vmatprep.subr.bf16.mxu0 0
        %1708 = vmatpush1.bf16.msra.mxu0 %v1685
        %1709 = vmatprep.subr.bf16.mxu0 0
        %1710 = vmatpush1.bf16.msra.mxu0 %v1686
        %1711 = vmatprep.subr.bf16.mxu0 0
        %1712 = vmatpush1.bf16.msra.mxu0 0
        %1713 = vmatprep.subr.bf16.mxu0 0
        %1714 = vmatpush1.bf16.msra.mxu0 0
        %1715 = vmatprep.subr.bf16.mxu0 0
        %1716 = vmatpush1.bf16.msra.mxu0 0
        %1717 = vmatprep.subr.bf16.mxu0 0
        %1718 = vmatpush1.bf16.msra.mxu0 0
        %1719 = vmatprep.subr.bf16.mxu0 0
        %1720 = vmatpush1.bf16.msra.mxu0 0
        %1721 = vmatprep.subr.bf16.mxu0 0
        %1722 = vmatpush1.bf16.msra.mxu0 0
        %1723 = vmatprep.subr.bf16.mxu0 0
        %1724 = vmatpush1.bf16.msra.mxu0 0
        %1725 = vmatprep.subr.bf16.mxu0 0
        %1726 = vmatpush1.bf16.msra.mxu0 0
        %1727 = vmatprep.mubr.bf16.mxu0 0
        %1728 = vmatmul.mubr.bf16.gmra.mrb[0].mxu0 %v1253
        %v1729 = vpop.f32.mrb[0].mxu0
        %v1730 = vadd.f32 0.0, %v1729
        %v1731 = vpop.f32.mrb[0].mxu0
        %v1732 = vpop.f32.mrb[0].mxu0
        %v1733 = vadd.f32 0.0, %v1732
        %v1734 = vpop.f32.mrb[0].mxu0
        %1735 = vmatprep.mubr.bf16.mxu0 0
        %1736 = vmatmul.mubr.bf16.gmra.mrb[0].mxu0 %v1254
        %v1737 = vpop.f32.mrb[0].mxu0
        %v1738 = vadd.f32 0.0, %v1737
        %v1739 = vpop.f32.mrb[0].mxu0
        %v1740 = vpop.f32.mrb[0].mxu0
        %v1741 = vadd.f32 0.0, %v1740
        %v1742 = vpop.f32.mrb[0].mxu0
        %1743 = vmatprep.mubr.bf16.mxu0 0
        %1744 = vmatmul.mubr.bf16.gmra.mrb[0].mxu0 %v1255
        %v1745 = vpop.f32.mrb[0].mxu0
        %v1746 = vadd.f32 0.0, %v1745
        %v1747 = vpop.f32.mrb[0].mxu0
        %v1748 = vpop.f32.mrb[0].mxu0
        %v1749 = vadd.f32 0.0, %v1748
        %v1750 = vpop.f32.mrb[0].mxu0
        %1751 = vmatprep.mubr.bf16.mxu0 0
        %1752 = vmatmul.mubr.bf16.gmra.mrb[0].mxu0 %v1256
        %v1753 = vpop.f32.mrb[0].mxu0
        %v1754 = vadd.f32 0.0, %v1753
        %v1755 = vpop.f32.mrb[0].mxu0
        %v1756 = vpop.f32.mrb[0].mxu0
        %v1757 = vadd.f32 0.0, %v1756
        %v1758 = vpop.f32.mrb[0].mxu0
        %1759 = vmatprep.mubr.bf16.mxu0 0
        %1760 = vmatmul.mubr.bf16.gmra.mrb[0].mxu0 %v1257
        %v1761 = vpop.f32.mrb[0].mxu0
        %v1762 = vadd.f32 0.0, %v1761
        %v1763 = vpop.f32.mrb[0].mxu0
        %v1764 = vpop.f32.mrb[0].mxu0
        %v1765 = vadd.f32 0.0, %v1764
        %v1766 = vpop.f32.mrb[0].mxu0
        %1767 = vmatprep.mubr.bf16.mxu0 0
        %1768 = vmatmul.mubr.bf16.gmra.mrb[0].mxu0 %v1258
        %v1769 = vpop.f32.mrb[0].mxu0
        %v1770 = vadd.f32 0.0, %v1769
        %v1771 = vpop.f32.mrb[0].mxu0
        %v1772 = vpop.f32.mrb[0].mxu0
        %v1773 = vadd.f32 0.0, %v1772
        %v1774 = vpop.f32.mrb[0].mxu0
        %1775 = vmatprep.mubr.bf16.mxu0 0
        %1776 = vmatmul.mubr.bf16.gmra.mrb[0].mxu0 %v1259
        %v1777 = vpop.f32.mrb[0].mxu0
        %v1778 = vadd.f32 0.0, %v1777
        %v1779 = vpop.f32.mrb[0].mxu0
        %v1780 = vpop.f32.mrb[0].mxu0
        %v1781 = vadd.f32 0.0, %v1780
        %v1782 = vpop.f32.mrb[0].mxu0
        %1783 = vmatprep.mubr.bf16.mxu0 0
        %1784 = vmatmul.mubr.bf16.gmra.mrb[0].mxu0 %v1260
        %v1785 = vpop.f32.mrb[0].mxu0
        %v1786 = vadd.f32 0.0, %v1785
        %v1787 = vpop.f32.mrb[0].mxu0
        %v1788 = vpop.f32.mrb[0].mxu0
        %v1789 = vadd.f32 0.0, %v1788
        %v1790 = vpop.f32.mrb[0].mxu0
        %1791 = vdwg.mxu0
        %v1792 = vrot.slane %v1730, 1
        %v1793 = vrot.slane %v1733, 1
        %v1794 = vrot.slane %v1738, 1
        %v1795 = vrot.slane %v1741, 1
        %v1796 = vrot.slane %v1746, 1
        %v1797 = vrot.slane %v1749, 1
        %v1798 = vrot.slane %v1754, 1
        %v1799 = vrot.slane %v1757, 1
        %v1800 = vrot.slane %v1762, 1
        %v1801 = vrot.slane %v1765, 1
        %v1802 = vrot.slane %v1770, 1
        %v1803 = vrot.slane %v1773, 1
        %v1804 = vrot.slane %v1778, 1
        %v1805 = vrot.slane %v1781, 1
        %v1806 = vrot.slane %v1786, 1
        %v1807 = vrot.slane %v1789, 1
        %v1808 = vsel %vm1136, %v1806, %v1807
        %v1809 = vsel %vm1136, %v1805, %v1806
        %v1810 = vsel %vm1136, %v1804, %v1805
        %v1811 = vsel %vm1136, %v1803, %v1804
        %v1812 = vsel %vm1136, %v1802, %v1803
        %v1813 = vsel %vm1136, %v1801, %v1802
        %v1814 = vsel %vm1136, %v1800, %v1801
        %v1815 = vsel %vm1136, %v1799, %v1800
        %v1816 = vsel %vm1136, %v1798, %v1799
        %v1817 = vsel %vm1136, %v1797, %v1798
        %v1818 = vsel %vm1136, %v1796, %v1797
        %v1819 = vsel %vm1136, %v1795, %v1796
        %v1820 = vsel %vm1136, %v1794, %v1795
        %v1821 = vsel %vm1136, %v1793, %v1794
        %v1822 = vsel %vm1136, %v1792, %v1793
        %v1823 = vsel %vm1136, %v1807, %v1792
        %v1824 = vsel %vm1169, %v1822, 0.0
        %v1825 = vsel %vm1170, %v1821, 0.0
        %v1826 = vsel %vm1171, %v1820, 0.0
        %v1827 = vsel %vm1172, %v1819, 0.0
        %v1828 = vsel %vm1173, %v1818, 0.0
        %v1829 = vsel %vm1174, %v1817, 0.0
        %v1830 = vsel %vm1175, %v1816, 0.0
        %v1831 = vsel %vm1176, %v1815, 0.0
        %v1832 = vsel %vm1177, %v1814, 0.0
        %v1833 = vsel %vm1178, %v1813, 0.0
        %v1834 = vsel %vm1179, %v1812, 0.0
        %v1835 = vsel %vm1180, %v1811, 0.0
        %v1836 = vsel %vm1181, %v1810, 0.0
        %v1837 = vsel %vm1182, %v1809, 0.0
        %v1838 = vsel %vm1183, %v1808, 0.0
        %v1839 = vsel %vm1184, %v1823, 0.0
        %v1840 = vadd.f32 %v1569, %v1824
        %v1841 = vadd.f32 %v1572, %v1825
        %v1842 = vadd.f32 %v1577, %v1826
        %v1843 = vadd.f32 %v1580, %v1827
        %v1844 = vadd.f32 %v1585, %v1828
        %v1845 = vadd.f32 %v1588, %v1829
        %v1846 = vadd.f32 %v1593, %v1830
        %v1847 = vadd.f32 %v1596, %v1831
        %v1848 = vadd.f32 %v1601, %v1832
        %v1849 = vadd.f32 %v1604, %v1833
        %v1850 = vadd.f32 %v1609, %v1834
        %v1851 = vadd.f32 %v1612, %v1835
        %v1852 = vadd.f32 %v1617, %v1836
        %v1853 = vadd.f32 %v1620, %v1837
        %v1854 = vadd.f32 %v1625, %v1838
        %v1855 = vadd.f32 %v1628, %v1839
        %v1856 = vlaneseq
        %v1857 = vshrl.u32 %v1856, 7
        %v1858 = vsub.s32 0, %v1857
        %v1859 = vrot.slane %v507, %v1858
        %v1860 = vadd.f32 %v1840, %v1859
        %v1861 = vadd.f32 %v1841, %v1859
        %v1862 = vadd.f32 %v1842, %v1859
        %v1863 = vadd.f32 %v1843, %v1859
        %v1864 = vadd.f32 %v1844, %v1859
        %v1865 = vadd.f32 %v1845, %v1859
        %v1866 = vadd.f32 %v1846, %v1859
        %v1867 = vadd.f32 %v1847, %v1859
        %v1868 = vadd.f32 %v1848, %v1859
        %v1869 = vadd.f32 %v1849, %v1859
        %v1870 = vadd.f32 %v1850, %v1859
        %v1871 = vadd.f32 %v1851, %v1859
        %v1872 = vadd.f32 %v1852, %v1859
        %v1873 = vadd.f32 %v1853, %v1859
        %v1874 = vadd.f32 %v1854, %v1859
        %v1875 = vadd.f32 %v1855, %v1859
        %v1876 = vunpack.c.l.bf16 %v249
        %v1877 = vunpack.c.l.bf16 %v250
        %v1878 = vunpack.c.l.bf16 %v251
        %v1879 = vunpack.c.l.bf16 %v252
        %v1880 = vunpack.c.l.bf16 %v253
        %v1881 = vunpack.c.l.bf16 %v254
        %v1882 = vunpack.c.l.bf16 %v255
        %v1883 = vunpack.c.l.bf16 %v256
        %v1884 = vunpack.c.l.bf16 %v257
        %v1885 = vunpack.c.l.bf16 %v258
        %v1886 = vunpack.c.l.bf16 %v259
        %v1887 = vunpack.c.l.bf16 %v260
        %v1888 = vunpack.c.l.bf16 %v261
        %v1889 = vunpack.c.l.bf16 %v262
        %v1890 = vunpack.c.l.bf16 %v263
        %v1891 = vunpack.c.l.bf16 %v264
        %v1892 = vadd.f32 %v1860, %v1876
        %v1893 = vadd.f32 %v1861, %v1877
        %v1894 = vadd.f32 %v1862, %v1878
        %v1895 = vadd.f32 %v1863, %v1879
        %v1896 = vadd.f32 %v1864, %v1880
        %v1897 = vadd.f32 %v1865, %v1881
        %v1898 = vadd.f32 %v1866, %v1882
        %v1899 = vadd.f32 %v1867, %v1883
        %v1900 = vadd.f32 %v1868, %v1884
        %v1901 = vadd.f32 %v1869, %v1885
        %v1902 = vadd.f32 %v1870, %v1886
        %v1903 = vadd.f32 %v1871, %v1887
        %v1904 = vadd.f32 %v1872, %v1888
        %v1905 = vadd.f32 %v1873, %v1889
        %v1906 = vadd.f32 %v1874, %v1890
        %v1907 = vadd.f32 %v1875, %v1891
        %v1908 = vmax.f32 %v1892, 0.0
        %v1909 = vmax.f32 %v1893, 0.0
        %v1910 = vmax.f32 %v1894, 0.0
        %v1911 = vmax.f32 %v1895, 0.0
        %v1912 = vmax.f32 %v1896, 0.0
        %v1913 = vmax.f32 %v1897, 0.0
        %v1914 = vmax.f32 %v1898, 0.0
        %v1915 = vmax.f32 %v1899, 0.0
        %v1916 = vmax.f32 %v1900, 0.0
        %v1917 = vmax.f32 %v1901, 0.0
        %v1918 = vmax.f32 %v1902, 0.0
        %v1919 = vmax.f32 %v1903, 0.0
        %v1920 = vmax.f32 %v1904, 0.0
        %v1921 = vmax.f32 %v1905, 0.0
        %v1922 = vmax.f32 %v1906, 0.0
        %v1923 = vmax.f32 %v1907, 0.0
        %1924 = vst [vmem:[%s245] sm:$0xff] %v1908
        %1925 = vst [vmem:[%s245 + $0x8] sm:$0xff] %v1909
        %1926 = vst [vmem:[%s245 + $0x10] sm:$0xff] %v1910
        %1927 = vst [vmem:[%s245 + $0x18] sm:$0xff] %v1911
        %1928 = vst [vmem:[%s245 + $0x20] sm:$0xff] %v1912
        %1929 = vst [vmem:[%s245 + $0x28] sm:$0xff] %v1913
        %1930 = vst [vmem:[%s245 + $0x30] sm:$0xff] %v1914
        %1931 = vst [vmem:[%s245 + $0x38] sm:$0xff] %v1915
        %1932 = vst [vmem:[%s245 + $0x40] sm:$0xff] %v1916
        %1933 = vst [vmem:[%s245 + $0x48] sm:$0xff] %v1917
        %1934 = vst [vmem:[%s245 + $0x50] sm:$0xff] %v1918
        %1935 = vst [vmem:[%s245 + $0x58] sm:$0xff] %v1919
        %1936 = vst [vmem:[%s245 + $0x60] sm:$0xff] %v1920
        %1937 = vst [vmem:[%s245 + $0x68] sm:$0xff] %v1921
        %1938 = vst [vmem:[%s245 + $0x70] sm:$0xff] %v1922
        %1939 = vst [vmem:[%s245 + $0x78] sm:$0xff] %v1923
        %s1940 = sand.u32 %s119, 1
        %s1941 = scalar_lea.sflag [#allocation4], %s1940
        %s1942 = sand.u32 %s119, 1
        %s1943 = smul.addr %s1942, 128
        %s1944 = scalar_lea.vmem [#allocation8], %s1943
        // Predicated region
        $region49: #{tpu_custom_call.1} parent=35 // pred_check
          %p1945 = pneg %p129
        $region50: #{tpu_custom_call.1} parent=35 // pred_check_branch
          %1947 = sbr.rel (%p1945) target = $region52
        $region51: #{tpu_custom_call.1} parent=35 // pred_region
          %s1948 = smul.u32 8, %s22
          %s1950 = ssub.s32 2048, 2048
          %1951 = vsyncadd %s1941, %s1950
          %s1952 = smul.addr %s1948, 2
          %s1953 = smul.addr %s1952, 128
          %s1954 = scalar_lea.hbm %s4, %s1953
          %s1955 = sshll.u32 %s1944, 4
          %s1956 = int_to_ptr.vmem [resolvable:$true] %s1955
          %1961 = dma.vmem_to_hbm [thread:$0]  %s1956, 2048, %s1954, %s1941, 128, 128, 8
        $region52: #{tpu_custom_call.1} parent=35 // pred_fallthru
          _
      $region36: #{tpu_custom_call.1} parent=5 // pred_fallthru
        _
      %p1962 = scmp.le.s32.totalorder 2, %s17
      // Predicated region
      $region53: #{tpu_custom_call.1} parent=5 // pred_check
        %p1963 = pneg %p1962
      $region54: #{tpu_custom_call.1} parent=5 // pred_check_branch
        %1965 = sbr.rel (%p1963) target = $region56
      $region55: #{tpu_custom_call.1} parent=5 // pred_region
        %s1966 = ssub.s32 %s17, 2
        // Predicated region
        $region57: #{tpu_custom_call.1} parent=55 // pred_check
          %p1967 = pneg %p135
        $region58: #{tpu_custom_call.1} parent=55 // pred_check_branch
          %1969 = sbr.rel (%p1967) target = $region60
        $region59: #{tpu_custom_call.1} parent=55 // pred_region
          %s1970 = sand.u32 %s120, 1
          %s1971 = scalar_lea.sflag [#allocation4], %s1970
          %s1972 = sand.u32 %s120, 1
          %s1973 = smul.addr %s1972, 128
          %s1974 = scalar_lea.vmem [#allocation8], %s1973
          %1975 = dma.done %s1971, 2048
        $region60: #{tpu_custom_call.1} parent=55 // pred_fallthru
          _
      $region56: #{tpu_custom_call.1} parent=5 // pred_fallthru
        _
    $region6: #{tpu_custom_call.1} parent=1 // loop_footer
      %s21 = sadd.s32 1, %s17
    $region7: #{tpu_custom_call.1} parent=1 // loop_footer_branch
      %16 = sbr.rel target = $region3
    $region8: #{tpu_custom_call.1} parent=1 // loop_exit
      _
    %1976 = vsyncpa [#allocation3], 1
    %s1977 = scalar_lea.sflag [#allocation3], 1
    %1978 = vsyncpa %s1977, 1
    %1979 = vsyncpa [#allocation6], 1
    %1980 = vsyncpa [#allocation4], 1
    %s1981 = scalar_lea.sflag [#allocation4], 1
    %1982 = vsyncpa %s1981, 1

</llo_original>
